<compile_context>
chip_gen: v5e
topology: v5e:2x2
jax: 0.10.0
libtpu: 0.0.40
codegen_flags: <defaults>
</compile_context>

<pallas_src>
import jax
import jax.numpy as jnp
from jax import lax
from jax.experimental import pallas as pl
from jax.experimental.pallas import tpu as pltpu


def _vmem():
    # whole-array block resident in VMEM (all shapes here are tiny)
    return pl.BlockSpec(memory_space=pltpu.MemorySpace.VMEM)


def _gat_attend(d_col, s_row, adj, z_src):
    """Masked GAT attention:  out[i] = sum_j softmax_j(lrelu(d[i]+s[j])) z[j].

    d_col: (R, 1) destination scores; s_row: (1, S) source scores;
    adj: (R, S) 0/1 mask (adj[i, j]==1 => edge j -> i); z_src: (S, D).
    Assumes every destination row has >= 1 incoming edge (self-loops).
    """
    e = d_col + s_row                                   # (R, S)
    e = jnp.where(e > 0, e, 0.01 * e)                   # leaky_relu, slope 0.01
    e = jnp.where(adj > 0, e, jnp.float32(-1e30))       # single additive mask
    p = jnp.exp(e - jnp.max(e, axis=1, keepdims=True))
    inv = pl.reciprocal(jnp.sum(p, axis=1, keepdims=True), approx=True)  # EUP
    alpha = p * inv
    return jnp.dot(alpha, z_src, preferred_element_type=jnp.float32)


# ----------------------------------------------------------------------------
# Single fused kernel for the whole forward pass.
# ----------------------------------------------------------------------------
def fusion_kernel(
    # embeddings
    exer_ref, kn_ref,
    # directed GAT (knowledge -> knowledge)
    w_dir_ref, a_src_dir_ref, a_dst_dir_ref, adj_d_ref,
    # undirected GAT
    w_und_ref, a_src_und_ref, a_dst_und_ref, adj_u_ref,
    # e_from_k GAT (adjacency: only the E exercise destination rows, (E, N))
    w_efk_ref, a_src_efk_ref, a_dst_efk_ref, adj_ek_ref,
    # knowledge fusion (k_attn_fc1 / k_attn_fc2, weights split per input half)
    w1a_ref, w1b_ref, b1_ref, w2a_ref, w2b_ref, b2_ref,
    # exercise fusion (e_attn_fc1)
    wea_ref, web_ref, be_ref,
    # outputs
    ex_out_ref, kn_out_ref,
    # scratch: concatenated [exer; kn] node features, (N, D)
    hall_ref,
):
    E = exer_ref.shape[0]
    K = kn_ref.shape[0]

    ex = exer_ref[...]
    kn = kn_ref[...]

    # ---- directed GAT over the knowledge graph -----------------------------
    z_dir = jnp.dot(kn, w_dir_ref[...], preferred_element_type=jnp.float32)
    d_dir = jnp.dot(z_dir, a_dst_dir_ref[...],
                    preferred_element_type=jnp.float32)              # (K, 1)
    s_dir = lax.dot_general(a_src_dir_ref[...], z_dir,
                            dimension_numbers=(((1,), (1,)), ((), ())),
                            preferred_element_type=jnp.float32)      # (1, K)
    B = _gat_attend(d_dir, s_dir, adj_d_ref[...], z_dir)             # (K, D)

    # ---- undirected GAT -----------------------------------------------------
    z_und = jnp.dot(kn, w_und_ref[...], preferred_element_type=jnp.float32)
    d_und = jnp.dot(z_und, a_dst_und_ref[...],
                    preferred_element_type=jnp.float32)
    s_und = lax.dot_general(a_src_und_ref[...], z_und,
                            dimension_numbers=(((1,), (1,)), ((), ())),
                            preferred_element_type=jnp.float32)
    C = _gat_attend(d_und, s_und, adj_u_ref[...], z_und)             # (K, D)

    # ---- e_from_k GAT over the joint [exer; kn] graph -----------------------
    # In-kernel replacement of torch.cat((exer_emb, kn_emb), dim=0).
    hall_ref[pl.ds(0, E), :] = ex
    hall_ref[pl.ds(E, K), :] = kn
    z_efk = jnp.dot(hall_ref[...], w_efk_ref[...],
                    preferred_element_type=jnp.float32)              # (N, D)
    # Only the exercise destination rows (0..E-1) are consumed downstream.
    d_efk = jnp.dot(z_efk[0:E, :], a_dst_efk_ref[...],
                    preferred_element_type=jnp.float32)              # (E, 1)
    s_efk = lax.dot_general(a_src_efk_ref[...], z_efk,
                            dimension_numbers=(((1,), (1,)), ((), ())),
                            preferred_element_type=jnp.float32)      # (1, N)
    B_e = _gat_attend(d_efk, s_efk, adj_ek_ref[...], z_efk)          # (E, D)

    # ---- knowledge fusion: softmax over two learned scores ------------------
    A = kn
    s1 = (jnp.dot(A, w1a_ref[...], preferred_element_type=jnp.float32)
          + jnp.dot(B, w1b_ref[...], preferred_element_type=jnp.float32)
          + b1_ref[...])                                             # (K, 1)
    s2 = (jnp.dot(A, w2a_ref[...], preferred_element_type=jnp.float32)
          + jnp.dot(C, w2b_ref[...], preferred_element_type=jnp.float32)
          + b2_ref[...])                                             # (K, 1)
    m = jnp.maximum(s1, s2)
    e1 = jnp.exp(s1 - m)
    e2 = jnp.exp(s2 - m)
    inv = pl.reciprocal(e1 + e2, approx=True)
    kn_out_ref[...] = A + (e1 * inv) * B + (e2 * inv) * C

    # ---- exercise fusion -----------------------------------------------------
    se = (jnp.dot(ex, wea_ref[...], preferred_element_type=jnp.float32)
          + jnp.dot(B_e, web_ref[...], preferred_element_type=jnp.float32)
          + be_ref[...])                                             # (E, 1)
    ex_out_ref[...] = ex + se * B_e


def fusion_forward(exer_emb, kn_emb, P):
    E, D = exer_emb.shape
    K = kn_emb.shape[0]
    N = E + K
    args = (
        exer_emb, kn_emb,
        *P["dir"], P["adj_d"],
        *P["und"], P["adj_u"],
        *P["efk"], P["adj_ek_rows"],
        *P["k_attn_fc1"], *P["k_attn_fc2"],
        *P["e_attn_fc1"],
    )
    return pl.pallas_call(
        fusion_kernel,
        out_shape=(jax.ShapeDtypeStruct((E, D), jnp.float32),
                   jax.ShapeDtypeStruct((K, D), jnp.float32)),
        in_specs=[_vmem()] * len(args),
        out_specs=(_vmem(), _vmem()),
        scratch_shapes=[pltpu.VMEM((N, D), jnp.float32)],
    )(*args)


# ----------------------------------------------------------------------------
# Pure-JAX reference (mirrors the original module: full graph GAT, then slice)
# ----------------------------------------------------------------------------
def ref_gat(h, w, a_src_row, a_dst_col, adj):
    z = h @ w
    d = z @ a_dst_col
    s = (z @ a_src_row[0])[None, :]
    e = d + s
    e = jnp.where(e > 0, e, 0.01 * e)
    e = jnp.where(adj > 0, e, -1e30)
    alpha = jax.nn.softmax(e, axis=1)
    return alpha @ z


def ref_forward(exer_emb, kn_emb, P, exer_n):
    A = kn_emb
    B = ref_gat(kn_emb, *P["dir"], P["adj_d"])
    C = ref_gat(kn_emb, *P["und"], P["adj_u"])
    ekg = jnp.concatenate([exer_emb, kn_emb], axis=0)
    efk = ref_gat(ekg, *P["efk"], P["adj_ek_full"])

    w1a, w1b, b1 = P["k_attn_fc1"]
    w2a, w2b, b2 = P["k_attn_fc2"]
    s1 = A @ w1a + B @ w1b + b1
    s2 = A @ w2a + C @ w2b + b2
    sc = jax.nn.softmax(jnp.concatenate([s1, s2], axis=1), axis=1)
    kn_out = A + sc[:, 0:1] * B + sc[:, 1:2] * C

    Ae = exer_emb
    Be = efk[:exer_n]
    wa, wb, bb = P["e_attn_fc1"]
    se = Ae @ wa + Be @ wb + bb
    ex_out = Ae + se * Be
    return ex_out, kn_out


if __name__ == "__main__":
    K = 32   # args.knowledge_n (knowledge node count == embedding dim)
    E = 16   # args.exer_n
    N = E + K

    key = jax.random.PRNGKey(0)
    keys = jax.random.split(key, 16)

    kn_emb = jax.random.normal(keys[0], (K, K), jnp.float32)
    exer_emb = jax.random.normal(keys[1], (E, K), jnp.float32)

    # synthetic adjacencies (dst, src); self-loops keep every softmax row valid
    def rand_adj(k, n):
        a = (jax.random.uniform(k, (n, n)) < 0.3).astype(jnp.float32)
        return jnp.maximum(a, jnp.eye(n, dtype=jnp.float32))

    adj_d = rand_adj(keys[2], K)                       # directed k -> k
    adj_u = rand_adj(keys[3], K)
    adj_u = jnp.maximum(adj_u, adj_u.T)                # undirected k -- k
    blk = (jax.random.uniform(keys[4], (E, K)) < 0.3).astype(jnp.float32)
    adj_ek_full = jnp.zeros((N, N), jnp.float32)
    adj_ek_full = adj_ek_full.at[:E, E:].set(blk)      # edges knowledge -> exercise
    adj_ek_full = jnp.maximum(adj_ek_full, jnp.eye(N, dtype=jnp.float32))

    # deterministic synthetic parameters
    def gat_params(k):
        k1, k2 = jax.random.split(k)
        W = 0.1 * jax.random.normal(k1, (K, K), jnp.float32)
        a = 0.1 * jax.random.normal(k2, (1, 2 * K), jnp.float32)
        a_src_row = a[:, :K]          # (1, K)  -- weights on source z
        a_dst_col = a[:, K:].T        # (K, 1)  -- weights on destination z
        return (W, a_src_row, a_dst_col)

    def attn_params(k):
        k1, k2 = jax.random.split(k)
        w = 0.1 * jax.random.normal(k1, (1, 2 * K), jnp.float32)
        b = 0.1 * jax.random.normal(k2, (1, 1), jnp.float32)
        return (w[:, :K].T, w[:, K:].T, b)   # (K,1), (K,1), (1,1)

    P = {
        "dir": gat_params(keys[5]),
        "und": gat_params(keys[6]),
        "efk": gat_params(keys[7]),
        "adj_d": adj_d,
        "adj_u": adj_u,
        "adj_ek_full": adj_ek_full,            # used only by the reference
        "adj_ek_rows": adj_ek_full[:E],        # (E, N) — kernel needs only these rows
        "k_attn_fc1": attn_params(keys[8]),
        "k_attn_fc2": attn_params(keys[9]),
        # k_attn_fc3 exists in __init__ but is unused in forward
        "e_attn_fc1": attn_params(keys[10]),
    }

    ex_out, kn_out = fusion_forward(exer_emb, kn_emb, P)
    jax.block_until_ready((ex_out, kn_out))

    ex_ref, kn_ref = ref_forward(exer_emb, kn_emb, P, E)
    assert ex_out.shape == (E, K) and kn_out.shape == (K, K)
    assert jnp.allclose(ex_out, ex_ref, atol=2e-2, rtol=2e-2)
    assert jnp.allclose(kn_out, kn_ref, atol=2e-2, rtol=2e-2)

    print("KERNEL_OK")
</pallas_src>

<mosaic_0001>
module attributes {stable_mosaic.version = 11 : i64} {
  func.func @fusion_kernel(%arg0: memref<16x32xf32, #tpu.memory_space<vmem>>, %arg1: memref<32x32xf32, #tpu.memory_space<vmem>>, %arg2: memref<32x32xf32, #tpu.memory_space<vmem>>, %arg3: memref<1x32xf32, #tpu.memory_space<vmem>>, %arg4: memref<32x1xf32, #tpu.memory_space<vmem>>, %arg5: memref<32x32xf32, #tpu.memory_space<vmem>>, %arg6: memref<32x32xf32, #tpu.memory_space<vmem>>, %arg7: memref<1x32xf32, #tpu.memory_space<vmem>>, %arg8: memref<32x1xf32, #tpu.memory_space<vmem>>, %arg9: memref<32x32xf32, #tpu.memory_space<vmem>>, %arg10: memref<32x32xf32, #tpu.memory_space<vmem>>, %arg11: memref<1x32xf32, #tpu.memory_space<vmem>>, %arg12: memref<32x1xf32, #tpu.memory_space<vmem>>, %arg13: memref<16x48xf32, #tpu.memory_space<vmem>>, %arg14: memref<32x1xf32, #tpu.memory_space<vmem>>, %arg15: memref<32x1xf32, #tpu.memory_space<vmem>>, %arg16: memref<1x1xf32, #tpu.memory_space<vmem>>, %arg17: memref<32x1xf32, #tpu.memory_space<vmem>>, %arg18: memref<32x1xf32, #tpu.memory_space<vmem>>, %arg19: memref<1x1xf32, #tpu.memory_space<vmem>>, %arg20: memref<32x1xf32, #tpu.memory_space<vmem>>, %arg21: memref<32x1xf32, #tpu.memory_space<vmem>>, %arg22: memref<1x1xf32, #tpu.memory_space<vmem>>, %arg23: memref<16x32xf32, #tpu.memory_space<vmem>>, %arg24: memref<32x32xf32, #tpu.memory_space<vmem>>, %arg25: memref<48x32xf32, #tpu.memory_space<vmem>>) attributes {dimension_semantics = [], scalar_prefetch = 0 : i64, scratch_operands = 1 : i64, tpu.core_type = #tpu.core_type<tc>} {
    %c0 = arith.constant 0 : index
    %c0_0 = arith.constant 0 : index
    %0 = vector.load %arg0[%c0, %c0_0] : memref<16x32xf32, #tpu.memory_space<vmem>>, vector<16x32xf32>
    %c0_1 = arith.constant 0 : index
    %c0_2 = arith.constant 0 : index
    %1 = vector.load %arg1[%c0_1, %c0_2] : memref<32x32xf32, #tpu.memory_space<vmem>>, vector<32x32xf32>
    %c0_3 = arith.constant 0 : index
    %c0_4 = arith.constant 0 : index
    %2 = vector.load %arg2[%c0_3, %c0_4] : memref<32x32xf32, #tpu.memory_space<vmem>>, vector<32x32xf32>
    %cst = arith.constant dense<0.000000e+00> : vector<32x32xf32>
    %3 = tpu.matmul %1, %2, %cst {dimension_numbers = #tpu.dot_dimension_numbers<[1], [0], [0], [1], [0, 0, 1, 1], [], []>} : vector<32x32xf32>, vector<32x32xf32>, vector<32x32xf32> -> vector<32x32xf32>
    %c0_5 = arith.constant 0 : index
    %c0_6 = arith.constant 0 : index
    %4 = vector.load %arg4[%c0_5, %c0_6] : memref<32x1xf32, #tpu.memory_space<vmem>>, vector<32x1xf32>
    %cst_7 = arith.constant dense<0.000000e+00> : vector<32x1xf32>
    %5 = tpu.matmul %3, %4, %cst_7 {dimension_numbers = #tpu.dot_dimension_numbers<[1], [0], [0], [1], [0, 0, 1, 1], [], []>} : vector<32x32xf32>, vector<32x1xf32>, vector<32x1xf32> -> vector<32x1xf32>
    %c0_8 = arith.constant 0 : index
    %c0_9 = arith.constant 0 : index
    %6 = vector.load %arg3[%c0_8, %c0_9] : memref<1x32xf32, #tpu.memory_space<vmem>>, vector<1x32xf32>
    %cst_10 = arith.constant dense<0.000000e+00> : vector<1x32xf32>
    %7 = tpu.matmul %6, %3, %cst_10 {dimension_numbers = #tpu.dot_dimension_numbers<[1], [1], [0], [0], [0, 0, 1, 0], [], []>} : vector<1x32xf32>, vector<32x32xf32>, vector<1x32xf32> -> vector<1x32xf32>
    %c0_11 = arith.constant 0 : index
    %c0_12 = arith.constant 0 : index
    %8 = vector.load %arg5[%c0_11, %c0_12] : memref<32x32xf32, #tpu.memory_space<vmem>>, vector<32x32xf32>
    %9 = vector.broadcast %5 : vector<32x1xf32> to vector<32x32xf32>
    %10 = vector.broadcast %7 : vector<1x32xf32> to vector<32x32xf32>
    %11 = arith.addf %9, %10 : vector<32x32xf32>
    %cst_13 = arith.constant 0.000000e+00 : f32
    %12 = vector.broadcast %cst_13 : f32 to vector<32x32xf32>
    %13 = arith.cmpf ogt, %11, %12 : vector<32x32xf32>
    %cst_14 = arith.constant 0.00999999977 : f32
    %14 = vector.broadcast %cst_14 : f32 to vector<32x32xf32>
    %15 = arith.mulf %14, %11 : vector<32x32xf32>
    %16 = arith.select %13, %11, %15 : vector<32x32xi1>, vector<32x32xf32>
    %cst_15 = arith.constant 0.000000e+00 : f32
    %17 = vector.broadcast %cst_15 : f32 to vector<32x32xf32>
    %18 = arith.cmpf ogt, %8, %17 : vector<32x32xf32>
    %cst_16 = arith.constant -1.000000e+30 : f32
    %19 = vector.broadcast %cst_16 : f32 to vector<32x32xf32>
    %20 = arith.select %18, %16, %19 : vector<32x32xi1>, vector<32x32xf32>
    %cst_17 = arith.constant dense<0xFF800000> : vector<32xf32>
    %21 = vector.multi_reduction <maximumf>, %20, %cst_17 [1] : vector<32x32xf32> to vector<32xf32>
    %22 = vector.shape_cast %21 : vector<32xf32> to vector<32x1xf32>
    %23 = vector.broadcast %22 : vector<32x1xf32> to vector<32x32xf32>
    %24 = arith.subf %20, %23 : vector<32x32xf32>
    %25 = math.exp %24 : vector<32x32xf32>
    %cst_18 = arith.constant dense<0.000000e+00> : vector<32xf32>
    %26 = vector.multi_reduction <add>, %25, %cst_18 [1] : vector<32x32xf32> to vector<32xf32>
    %27 = vector.shape_cast %26 : vector<32xf32> to vector<32x1xf32>
    %28 = tpu.reciprocal %27 {approx = true} : vector<32x1xf32> -> vector<32x1xf32>
    %29 = vector.broadcast %28 : vector<32x1xf32> to vector<32x32xf32>
    %30 = arith.mulf %25, %29 : vector<32x32xf32>
    %cst_19 = arith.constant dense<0.000000e+00> : vector<32x32xf32>
    %31 = tpu.matmul %30, %3, %cst_19 {dimension_numbers = #tpu.dot_dimension_numbers<[1], [0], [0], [1], [0, 0, 1, 1], [], []>} : vector<32x32xf32>, vector<32x32xf32>, vector<32x32xf32> -> vector<32x32xf32>
    %c0_20 = arith.constant 0 : index
    %c0_21 = arith.constant 0 : index
    %32 = vector.load %arg6[%c0_20, %c0_21] : memref<32x32xf32, #tpu.memory_space<vmem>>, vector<32x32xf32>
    %cst_22 = arith.constant dense<0.000000e+00> : vector<32x32xf32>
    %33 = tpu.matmul %1, %32, %cst_22 {dimension_numbers = #tpu.dot_dimension_numbers<[1], [0], [0], [1], [0, 0, 1, 1], [], []>} : vector<32x32xf32>, vector<32x32xf32>, vector<32x32xf32> -> vector<32x32xf32>
    %c0_23 = arith.constant 0 : index
    %c0_24 = arith.constant 0 : index
    %34 = vector.load %arg8[%c0_23, %c0_24] : memref<32x1xf32, #tpu.memory_space<vmem>>, vector<32x1xf32>
    %cst_25 = arith.constant dense<0.000000e+00> : vector<32x1xf32>
    %35 = tpu.matmul %33, %34, %cst_25 {dimension_numbers = #tpu.dot_dimension_numbers<[1], [0], [0], [1], [0, 0, 1, 1], [], []>} : vector<32x32xf32>, vector<32x1xf32>, vector<32x1xf32> -> vector<32x1xf32>
    %c0_26 = arith.constant 0 : index
    %c0_27 = arith.constant 0 : index
    %36 = vector.load %arg7[%c0_26, %c0_27] : memref<1x32xf32, #tpu.memory_space<vmem>>, vector<1x32xf32>
    %cst_28 = arith.constant dense<0.000000e+00> : vector<1x32xf32>
    %37 = tpu.matmul %36, %33, %cst_28 {dimension_numbers = #tpu.dot_dimension_numbers<[1], [1], [0], [0], [0, 0, 1, 0], [], []>} : vector<1x32xf32>, vector<32x32xf32>, vector<1x32xf32> -> vector<1x32xf32>
    %c0_29 = arith.constant 0 : index
    %c0_30 = arith.constant 0 : index
    %38 = vector.load %arg9[%c0_29, %c0_30] : memref<32x32xf32, #tpu.memory_space<vmem>>, vector<32x32xf32>
    %39 = vector.broadcast %35 : vector<32x1xf32> to vector<32x32xf32>
    %40 = vector.broadcast %37 : vector<1x32xf32> to vector<32x32xf32>
    %41 = arith.addf %39, %40 : vector<32x32xf32>
    %cst_31 = arith.constant 0.000000e+00 : f32
    %42 = vector.broadcast %cst_31 : f32 to vector<32x32xf32>
    %43 = arith.cmpf ogt, %41, %42 : vector<32x32xf32>
    %cst_32 = arith.constant 0.00999999977 : f32
    %44 = vector.broadcast %cst_32 : f32 to vector<32x32xf32>
    %45 = arith.mulf %44, %41 : vector<32x32xf32>
    %46 = arith.select %43, %41, %45 : vector<32x32xi1>, vector<32x32xf32>
    %cst_33 = arith.constant 0.000000e+00 : f32
    %47 = vector.broadcast %cst_33 : f32 to vector<32x32xf32>
    %48 = arith.cmpf ogt, %38, %47 : vector<32x32xf32>
    %cst_34 = arith.constant -1.000000e+30 : f32
    %49 = vector.broadcast %cst_34 : f32 to vector<32x32xf32>
    %50 = arith.select %48, %46, %49 : vector<32x32xi1>, vector<32x32xf32>
    %cst_35 = arith.constant dense<0xFF800000> : vector<32xf32>
    %51 = vector.multi_reduction <maximumf>, %50, %cst_35 [1] : vector<32x32xf32> to vector<32xf32>
    %52 = vector.shape_cast %51 : vector<32xf32> to vector<32x1xf32>
    %53 = vector.broadcast %52 : vector<32x1xf32> to vector<32x32xf32>
    %54 = arith.subf %50, %53 : vector<32x32xf32>
    %55 = math.exp %54 : vector<32x32xf32>
    %cst_36 = arith.constant dense<0.000000e+00> : vector<32xf32>
    %56 = vector.multi_reduction <add>, %55, %cst_36 [1] : vector<32x32xf32> to vector<32xf32>
    %57 = vector.shape_cast %56 : vector<32xf32> to vector<32x1xf32>
    %58 = tpu.reciprocal %57 {approx = true} : vector<32x1xf32> -> vector<32x1xf32>
    %59 = vector.broadcast %58 : vector<32x1xf32> to vector<32x32xf32>
    %60 = arith.mulf %55, %59 : vector<32x32xf32>
    %cst_37 = arith.constant dense<0.000000e+00> : vector<32x32xf32>
    %61 = tpu.matmul %60, %33, %cst_37 {dimension_numbers = #tpu.dot_dimension_numbers<[1], [0], [0], [1], [0, 0, 1, 1], [], []>} : vector<32x32xf32>, vector<32x32xf32>, vector<32x32xf32> -> vector<32x32xf32>
    %c0_38 = arith.constant 0 : index
    %c0_39 = arith.constant 0 : index
    %62 = vector.load %arg25[%c0_38, %c0_39] : memref<48x32xf32, #tpu.memory_space<vmem>>, vector<16x32xf32>
    tpu.vector_store %arg25[%c0_38, %c0_39], %0 {strides = array<i32>} : memref<48x32xf32, #tpu.memory_space<vmem>>, vector<16x32xf32>,
    %c16 = arith.constant 16 : index
    %c0_40 = arith.constant 0 : index
    %63 = vector.load %arg25[%c16, %c0_40] : memref<48x32xf32, #tpu.memory_space<vmem>>, vector<32x32xf32>
    tpu.vector_store %arg25[%c16, %c0_40], %1 {strides = array<i32>} : memref<48x32xf32, #tpu.memory_space<vmem>>, vector<32x32xf32>,
    %c0_41 = arith.constant 0 : index
    %c0_42 = arith.constant 0 : index
    %64 = vector.load %arg25[%c0_41, %c0_42] : memref<48x32xf32, #tpu.memory_space<vmem>>, vector<48x32xf32>
    %c0_43 = arith.constant 0 : index
    %c0_44 = arith.constant 0 : index
    %65 = vector.load %arg10[%c0_43, %c0_44] : memref<32x32xf32, #tpu.memory_space<vmem>>, vector<32x32xf32>
    %cst_45 = arith.constant dense<0.000000e+00> : vector<48x32xf32>
    %66 = tpu.matmul %64, %65, %cst_45 {dimension_numbers = #tpu.dot_dimension_numbers<[1], [0], [0], [1], [0, 0, 1, 1], [], []>} : vector<48x32xf32>, vector<32x32xf32>, vector<48x32xf32> -> vector<48x32xf32>
    %67 = vector.extract_strided_slice %66 {offsets = [0, 0], sizes = [16, 32], strides = [1, 1]} : vector<48x32xf32> to vector<16x32xf32>
    %c0_46 = arith.constant 0 : index
    %c0_47 = arith.constant 0 : index
    %68 = vector.load %arg12[%c0_46, %c0_47] : memref<32x1xf32, #tpu.memory_space<vmem>>, vector<32x1xf32>
    %cst_48 = arith.constant dense<0.000000e+00> : vector<16x1xf32>
    %69 = tpu.matmul %67, %68, %cst_48 {dimension_numbers = #tpu.dot_dimension_numbers<[1], [0], [0], [1], [0, 0, 1, 1], [], []>} : vector<16x32xf32>, vector<32x1xf32>, vector<16x1xf32> -> vector<16x1xf32>
    %c0_49 = arith.constant 0 : index
    %c0_50 = arith.constant 0 : index
    %70 = vector.load %arg11[%c0_49, %c0_50] : memref<1x32xf32, #tpu.memory_space<vmem>>, vector<1x32xf32>
    %cst_51 = arith.constant dense<0.000000e+00> : vector<1x48xf32>
    %71 = tpu.matmul %70, %66, %cst_51 {dimension_numbers = #tpu.dot_dimension_numbers<[1], [1], [0], [0], [0, 0, 1, 0], [], []>} : vector<1x32xf32>, vector<48x32xf32>, vector<1x48xf32> -> vector<1x48xf32>
    %c0_52 = arith.constant 0 : index
    %c0_53 = arith.constant 0 : index
    %72 = vector.load %arg13[%c0_52, %c0_53] : memref<16x48xf32, #tpu.memory_space<vmem>>, vector<16x48xf32>
    %73 = vector.broadcast %69 : vector<16x1xf32> to vector<16x48xf32>
    %74 = vector.broadcast %71 : vector<1x48xf32> to vector<16x48xf32>
    %75 = arith.addf %73, %74 : vector<16x48xf32>
    %cst_54 = arith.constant 0.000000e+00 : f32
    %76 = vector.broadcast %cst_54 : f32 to vector<16x48xf32>
    %77 = arith.cmpf ogt, %75, %76 : vector<16x48xf32>
    %cst_55 = arith.constant 0.00999999977 : f32
    %78 = vector.broadcast %cst_55 : f32 to vector<16x48xf32>
    %79 = arith.mulf %78, %75 : vector<16x48xf32>
    %80 = arith.select %77, %75, %79 : vector<16x48xi1>, vector<16x48xf32>
    %cst_56 = arith.constant 0.000000e+00 : f32
    %81 = vector.broadcast %cst_56 : f32 to vector<16x48xf32>
    %82 = arith.cmpf ogt, %72, %81 : vector<16x48xf32>
    %cst_57 = arith.constant -1.000000e+30 : f32
    %83 = vector.broadcast %cst_57 : f32 to vector<16x48xf32>
    %84 = arith.select %82, %80, %83 : vector<16x48xi1>, vector<16x48xf32>
    %cst_58 = arith.constant dense<0xFF800000> : vector<16xf32>
    %85 = vector.multi_reduction <maximumf>, %84, %cst_58 [1] : vector<16x48xf32> to vector<16xf32>
    %86 = vector.shape_cast %85 : vector<16xf32> to vector<16x1xf32>
    %87 = vector.broadcast %86 : vector<16x1xf32> to vector<16x48xf32>
    %88 = arith.subf %84, %87 : vector<16x48xf32>
    %89 = math.exp %88 : vector<16x48xf32>
    %cst_59 = arith.constant dense<0.000000e+00> : vector<16xf32>
    %90 = vector.multi_reduction <add>, %89, %cst_59 [1] : vector<16x48xf32> to vector<16xf32>
    %91 = vector.shape_cast %90 : vector<16xf32> to vector<16x1xf32>
    %92 = tpu.reciprocal %91 {approx = true} : vector<16x1xf32> -> vector<16x1xf32>
    %93 = vector.broadcast %92 : vector<16x1xf32> to vector<16x48xf32>
    %94 = arith.mulf %89, %93 : vector<16x48xf32>
    %cst_60 = arith.constant dense<0.000000e+00> : vector<16x32xf32>
    %95 = tpu.matmul %94, %66, %cst_60 {dimension_numbers = #tpu.dot_dimension_numbers<[1], [0], [0], [1], [0, 0, 1, 1], [], []>} : vector<16x48xf32>, vector<48x32xf32>, vector<16x32xf32> -> vector<16x32xf32>
    %c0_61 = arith.constant 0 : index
    %c0_62 = arith.constant 0 : index
    %96 = vector.load %arg14[%c0_61, %c0_62] : memref<32x1xf32, #tpu.memory_space<vmem>>, vector<32x1xf32>
    %cst_63 = arith.constant dense<0.000000e+00> : vector<32x1xf32>
    %97 = tpu.matmul %1, %96, %cst_63 {dimension_numbers = #tpu.dot_dimension_numbers<[1], [0], [0], [1], [0, 0, 1, 1], [], []>} : vector<32x32xf32>, vector<32x1xf32>, vector<32x1xf32> -> vector<32x1xf32>
    %c0_64 = arith.constant 0 : index
    %c0_65 = arith.constant 0 : index
    %98 = vector.load %arg15[%c0_64, %c0_65] : memref<32x1xf32, #tpu.memory_space<vmem>>, vector<32x1xf32>
    %cst_66 = arith.constant dense<0.000000e+00> : vector<32x1xf32>
    %99 = tpu.matmul %31, %98, %cst_66 {dimension_numbers = #tpu.dot_dimension_numbers<[1], [0], [0], [1], [0, 0, 1, 1], [], []>} : vector<32x32xf32>, vector<32x1xf32>, vector<32x1xf32> -> vector<32x1xf32>
    %100 = arith.addf %97, %99 : vector<32x1xf32>
    %c0_67 = arith.constant 0 : index
    %c0_68 = arith.constant 0 : index
    %101 = vector.load %arg16[%c0_67, %c0_68] : memref<1x1xf32, #tpu.memory_space<vmem>>, vector<1x1xf32>
    %102 = vector.broadcast %101 : vector<1x1xf32> to vector<32x1xf32>
    %103 = arith.addf %100, %102 : vector<32x1xf32>
    %c0_69 = arith.constant 0 : index
    %c0_70 = arith.constant 0 : index
    %104 = vector.load %arg17[%c0_69, %c0_70] : memref<32x1xf32, #tpu.memory_space<vmem>>, vector<32x1xf32>
    %cst_71 = arith.constant dense<0.000000e+00> : vector<32x1xf32>
    %105 = tpu.matmul %1, %104, %cst_71 {dimension_numbers = #tpu.dot_dimension_numbers<[1], [0], [0], [1], [0, 0, 1, 1], [], []>} : vector<32x32xf32>, vector<32x1xf32>, vector<32x1xf32> -> vector<32x1xf32>
    %c0_72 = arith.constant 0 : index
    %c0_73 = arith.constant 0 : index
    %106 = vector.load %arg18[%c0_72, %c0_73] : memref<32x1xf32, #tpu.memory_space<vmem>>, vector<32x1xf32>
    %cst_74 = arith.constant dense<0.000000e+00> : vector<32x1xf32>
    %107 = tpu.matmul %61, %106, %cst_74 {dimension_numbers = #tpu.dot_dimension_numbers<[1], [0], [0], [1], [0, 0, 1, 1], [], []>} : vector<32x32xf32>, vector<32x1xf32>, vector<32x1xf32> -> vector<32x1xf32>
    %108 = arith.addf %105, %107 : vector<32x1xf32>
    %c0_75 = arith.constant 0 : index
    %c0_76 = arith.constant 0 : index
    %109 = vector.load %arg19[%c0_75, %c0_76] : memref<1x1xf32, #tpu.memory_space<vmem>>, vector<1x1xf32>
    %110 = vector.broadcast %109 : vector<1x1xf32> to vector<32x1xf32>
    %111 = arith.addf %108, %110 : vector<32x1xf32>
    %112 = arith.maximumf %103, %111 : vector<32x1xf32>
    %113 = arith.subf %103, %112 : vector<32x1xf32>
    %114 = math.exp %113 : vector<32x1xf32>
    %115 = arith.subf %111, %112 : vector<32x1xf32>
    %116 = math.exp %115 : vector<32x1xf32>
    %117 = arith.addf %114, %116 : vector<32x1xf32>
    %118 = tpu.reciprocal %117 {approx = true} : vector<32x1xf32> -> vector<32x1xf32>
    %119 = arith.mulf %114, %118 : vector<32x1xf32>
    %120 = vector.broadcast %119 : vector<32x1xf32> to vector<32x32xf32>
    %121 = arith.mulf %120, %31 : vector<32x32xf32>
    %122 = arith.addf %1, %121 : vector<32x32xf32>
    %123 = arith.mulf %116, %118 : vector<32x1xf32>
    %124 = vector.broadcast %123 : vector<32x1xf32> to vector<32x32xf32>
    %125 = arith.mulf %124, %61 : vector<32x32xf32>
    %126 = arith.addf %122, %125 : vector<32x32xf32>
    %c0_77 = arith.constant 0 : index
    %c0_78 = arith.constant 0 : index
    %127 = vector.load %arg24[%c0_77, %c0_78] : memref<32x32xf32, #tpu.memory_space<vmem>>, vector<32x32xf32>
    tpu.vector_store %arg24[%c0_77, %c0_78], %126 {strides = array<i32>} : memref<32x32xf32, #tpu.memory_space<vmem>>, vector<32x32xf32>,
    %c0_79 = arith.constant 0 : index
    %c0_80 = arith.constant 0 : index
    %128 = vector.load %arg20[%c0_79, %c0_80] : memref<32x1xf32, #tpu.memory_space<vmem>>, vector<32x1xf32>
    %cst_81 = arith.constant dense<0.000000e+00> : vector<16x1xf32>
    %129 = tpu.matmul %0, %128, %cst_81 {dimension_numbers = #tpu.dot_dimension_numbers<[1], [0], [0], [1], [0, 0, 1, 1], [], []>} : vector<16x32xf32>, vector<32x1xf32>, vector<16x1xf32> -> vector<16x1xf32>
    %c0_82 = arith.constant 0 : index
    %c0_83 = arith.constant 0 : index
    %130 = vector.load %arg21[%c0_82, %c0_83] : memref<32x1xf32, #tpu.memory_space<vmem>>, vector<32x1xf32>
    %cst_84 = arith.constant dense<0.000000e+00> : vector<16x1xf32>
    %131 = tpu.matmul %95, %130, %cst_84 {dimension_numbers = #tpu.dot_dimension_numbers<[1], [0], [0], [1], [0, 0, 1, 1], [], []>} : vector<16x32xf32>, vector<32x1xf32>, vector<16x1xf32> -> vector<16x1xf32>
    %132 = arith.addf %129, %131 : vector<16x1xf32>
    %c0_85 = arith.constant 0 : index
    %c0_86 = arith.constant 0 : index
    %133 = vector.load %arg22[%c0_85, %c0_86] : memref<1x1xf32, #tpu.memory_space<vmem>>, vector<1x1xf32>
    %134 = vector.broadcast %133 : vector<1x1xf32> to vector<16x1xf32>
    %135 = arith.addf %132, %134 : vector<16x1xf32>
    %136 = vector.broadcast %135 : vector<16x1xf32> to vector<16x32xf32>
    %137 = arith.mulf %136, %95 : vector<16x32xf32>
    %138 = arith.addf %0, %137 : vector<16x32xf32>
    %c0_87 = arith.constant 0 : index
    %c0_88 = arith.constant 0 : index
    %139 = vector.load %arg23[%c0_87, %c0_88] : memref<16x32xf32, #tpu.memory_space<vmem>>, vector<16x32xf32>
    tpu.vector_store %arg23[%c0_87, %c0_88], %138 {strides = array<i32>} : memref<16x32xf32, #tpu.memory_space<vmem>>, vector<16x32xf32>,
    return
  }
}

</mosaic_0001>

<llo_original>
// kernel: tpu_custom_call.1
$region0: #{tpu_custom_call.1}
  #allocation0 [shape = 'u32[]', space=smem, size = 0x4, offset = 0x4, fixed_abs, tag = 'smem constant byte address 0x4 - core index']
  #allocation1 [shape = 'u32[72,128]{1,0:T(1,128)}', space=vmem, size = 0x9000, scoped, tag = 'internal scratch']
  #allocation2 [shape = 'f32[48,32]{1,0:T(8,128)}', space=vmem, size = 0x6000, scoped, tag = 'scratch operand']
  #allocation3 [shape = 'f32[1,1]{1,0:T(1,128)S(1)}', space=vmem, size = 0x200, scoped, tag = 'scoped memory for tpu_custom_call.1']
  #allocation4 [shape = 'f32[1,1]{1,0:T(1,128)S(1)}', space=vmem, size = 0x200, scoped, tag = 'scoped memory for tpu_custom_call.1']
  #allocation5 [shape = 'f32[1,1]{1,0:T(1,128)S(1)}', space=vmem, size = 0x200, scoped, tag = 'scoped memory for tpu_custom_call.1']
  %s0 = inlined_call_operand.vmem [shape: f32[16,32], index: 0, kind: input, shape index: {}]
  %s1 = inlined_call_operand.vmem [shape: f32[32,32], index: 1, kind: input, shape index: {}]
  %s2 = inlined_call_operand.vmem [shape: f32[32,32], index: 2, kind: input, shape index: {}]
  %s3 = inlined_call_operand.vmem [shape: f32[1,32], index: 3, kind: input, shape index: {}]
  %s4 = inlined_call_operand.vmem [shape: f32[32,1], index: 4, kind: input, shape index: {}]
  %s5 = inlined_call_operand.vmem [shape: f32[32,32], index: 5, kind: input, shape index: {}]
  %s6 = inlined_call_operand.vmem [shape: f32[32,32], index: 6, kind: input, shape index: {}]
  %s7 = inlined_call_operand.vmem [shape: f32[1,32], index: 7, kind: input, shape index: {}]
  %s8 = inlined_call_operand.vmem [shape: f32[32,1], index: 8, kind: input, shape index: {}]
  %s9 = inlined_call_operand.vmem [shape: f32[32,32], index: 9, kind: input, shape index: {}]
  %s10 = inlined_call_operand.vmem [shape: f32[32,32], index: 10, kind: input, shape index: {}]
  %s11 = inlined_call_operand.vmem [shape: f32[1,32], index: 11, kind: input, shape index: {}]
  %s12 = inlined_call_operand.vmem [shape: f32[32,1], index: 12, kind: input, shape index: {}]
  %s13 = inlined_call_operand.vmem [shape: f32[16,48], index: 13, kind: input, shape index: {}]
  %s14 = inlined_call_operand.vmem [shape: f32[32,1], index: 14, kind: input, shape index: {}]
  %s15 = inlined_call_operand.vmem [shape: f32[32,1], index: 15, kind: input, shape index: {}]
  %s16 = inlined_call_operand.<no memory space> [shape: f32[1,1], index: 16, kind: input, shape index: {}]
  %s17 = inlined_call_operand.vmem [shape: f32[32,1], index: 17, kind: input, shape index: {}]
  %s18 = inlined_call_operand.vmem [shape: f32[32,1], index: 18, kind: input, shape index: {}]
  %s19 = inlined_call_operand.<no memory space> [shape: f32[1,1], index: 19, kind: input, shape index: {}]
  %s20 = inlined_call_operand.vmem [shape: f32[32,1], index: 20, kind: input, shape index: {}]
  %s21 = inlined_call_operand.vmem [shape: f32[32,1], index: 21, kind: input, shape index: {}]
  %s22 = inlined_call_operand.<no memory space> [shape: f32[1,1], index: 22, kind: input, shape index: {}]
  %s23 = inlined_call_operand.hbm [shape: f32[16,32], index: 23, kind: output, shape index: {0}]
  %s24 = inlined_call_operand.hbm [shape: f32[32,32], index: 24, kind: output, shape index: {1}]
  %25 = xla_tuple %s23, %s24
  %s26 = sld [smem:[#allocation0]]
  $region110: #{tpu_custom_call.1} parent=0
    _
  %s28 = ssub.s32 1, %s26
  %s29 = scalar_select 0, %s28, %s26
  %v30 = vstv %s16
  %31 = vst [vmem:[#allocation3] sm:$0x1] %v30
  %v32 = vstv %s19
  %33 = vst [vmem:[#allocation4] sm:$0x1] %v32
  %v34 = vstv %s22
  %35 = vst [vmem:[#allocation5] sm:$0x1] %v34
  $region1: #{tpu_custom_call.1} parent=0
    #allocation6 [shape = 'u8[8192]{0}', space=vmem, size = 0x2000, scoped, tag = 'output window, operand 0, single buffered']
    #allocation7 [shape = 's32[1]{0}', space=sflag, size = 0x4, scoped, tag = 'scoped memory for tpu_custom_call.1']
    #allocation8 [shape = 'u8[16384]{0}', space=vmem, size = 0x4000, scoped, tag = 'output window, operand 1, single buffered']
    #allocation9 [shape = 's32[1]{0}', space=sflag, size = 0x4, scoped, tag = 'scoped memory for tpu_custom_call.1']
    %36 = vsyncpa [#allocation7], 0
    %37 = vsyncpa [#allocation9], 0
    // Predicated region
    $region2: #{tpu_custom_call.1} parent=1 // pred_check
      _
    $region3: #{tpu_custom_call.1} parent=1 // pred_check_branch
      %39 = sbr.rel (0) target = $region5
    $region4: #{tpu_custom_call.1} parent=1 // pred_region
      _
    $region5: #{tpu_custom_call.1} parent=1 // pred_fallthru
      _
    // Predicated region
    $region6: #{tpu_custom_call.1} parent=1 // pred_check
      _
    $region7: #{tpu_custom_call.1} parent=1 // pred_check_branch
      %41 = sbr.rel (0) target = $region9
    $region8: #{tpu_custom_call.1} parent=1 // pred_region
      _
    $region9: #{tpu_custom_call.1} parent=1 // pred_fallthru
      _
    // Predicated region
    $region10: #{tpu_custom_call.1} parent=1 // pred_check
      _
    $region11: #{tpu_custom_call.1} parent=1 // pred_check_branch
      %43 = sbr.rel (0) target = $region13
    $region12: #{tpu_custom_call.1} parent=1 // pred_region
      _
    $region13: #{tpu_custom_call.1} parent=1 // pred_fallthru
      _
    // Predicated region
    $region14: #{tpu_custom_call.1} parent=1 // pred_check
      _
    $region15: #{tpu_custom_call.1} parent=1 // pred_check_branch
      %45 = sbr.rel (0) target = $region17
    $region16: #{tpu_custom_call.1} parent=1 // pred_region
      _
    $region17: #{tpu_custom_call.1} parent=1 // pred_fallthru
      _
    // Predicated region
    $region18: #{tpu_custom_call.1} parent=1 // pred_check
      _
    $region19: #{tpu_custom_call.1} parent=1 // pred_check_branch
      %47 = sbr.rel (0) target = $region21
    $region20: #{tpu_custom_call.1} parent=1 // pred_region
      _
    $region21: #{tpu_custom_call.1} parent=1 // pred_fallthru
      _
    // Predicated region
    $region22: #{tpu_custom_call.1} parent=1 // pred_check
      _
    $region23: #{tpu_custom_call.1} parent=1 // pred_check_branch
      %49 = sbr.rel (0) target = $region25
    $region24: #{tpu_custom_call.1} parent=1 // pred_region
      _
    $region25: #{tpu_custom_call.1} parent=1 // pred_fallthru
      _
    // Predicated region
    $region26: #{tpu_custom_call.1} parent=1 // pred_check
      _
    $region27: #{tpu_custom_call.1} parent=1 // pred_check_branch
      %51 = sbr.rel (0) target = $region29
    $region28: #{tpu_custom_call.1} parent=1 // pred_region
      _
    $region29: #{tpu_custom_call.1} parent=1 // pred_fallthru
      _
    // Predicated region
    $region30: #{tpu_custom_call.1} parent=1 // pred_check
      _
    $region31: #{tpu_custom_call.1} parent=1 // pred_check_branch
      %53 = sbr.rel (0) target = $region33
    $region32: #{tpu_custom_call.1} parent=1 // pred_region
      _
    $region33: #{tpu_custom_call.1} parent=1 // pred_fallthru
      _
    // Predicated region
    $region34: #{tpu_custom_call.1} parent=1 // pred_check
      _
    $region35: #{tpu_custom_call.1} parent=1 // pred_check_branch
      %55 = sbr.rel (0) target = $region37
    $region36: #{tpu_custom_call.1} parent=1 // pred_region
      _
    $region37: #{tpu_custom_call.1} parent=1 // pred_fallthru
      _
    // Predicated region
    $region38: #{tpu_custom_call.1} parent=1 // pred_check
      _
    $region39: #{tpu_custom_call.1} parent=1 // pred_check_branch
      %57 = sbr.rel (0) target = $region41
    $region40: #{tpu_custom_call.1} parent=1 // pred_region
      _
    $region41: #{tpu_custom_call.1} parent=1 // pred_fallthru
      _
    // Predicated region
    $region42: #{tpu_custom_call.1} parent=1 // pred_check
      _
    $region43: #{tpu_custom_call.1} parent=1 // pred_check_branch
      %59 = sbr.rel (0) target = $region45
    $region44: #{tpu_custom_call.1} parent=1 // pred_region
      _
    $region45: #{tpu_custom_call.1} parent=1 // pred_fallthru
      _
    // Predicated region
    $region46: #{tpu_custom_call.1} parent=1 // pred_check
      _
    $region47: #{tpu_custom_call.1} parent=1 // pred_check_branch
      %61 = sbr.rel (0) target = $region49
    $region48: #{tpu_custom_call.1} parent=1 // pred_region
      _
    $region49: #{tpu_custom_call.1} parent=1 // pred_fallthru
      _
    // Predicated region
    $region50: #{tpu_custom_call.1} parent=1 // pred_check
      _
    $region51: #{tpu_custom_call.1} parent=1 // pred_check_branch
      %63 = sbr.rel (0) target = $region53
    $region52: #{tpu_custom_call.1} parent=1 // pred_region
      _
    $region53: #{tpu_custom_call.1} parent=1 // pred_fallthru
      _
    // Predicated region
    $region54: #{tpu_custom_call.1} parent=1 // pred_check
      _
    $region55: #{tpu_custom_call.1} parent=1 // pred_check_branch
      %65 = sbr.rel (0) target = $region57
    $region56: #{tpu_custom_call.1} parent=1 // pred_region
      _
    $region57: #{tpu_custom_call.1} parent=1 // pred_fallthru
      _
    // Predicated region
    $region58: #{tpu_custom_call.1} parent=1 // pred_check
      _
    $region59: #{tpu_custom_call.1} parent=1 // pred_check_branch
      %67 = sbr.rel (0) target = $region61
    $region60: #{tpu_custom_call.1} parent=1 // pred_region
      _
    $region61: #{tpu_custom_call.1} parent=1 // pred_fallthru
      _
    // Predicated region
    $region62: #{tpu_custom_call.1} parent=1 // pred_check
      _
    $region63: #{tpu_custom_call.1} parent=1 // pred_check_branch
      %69 = sbr.rel (0) target = $region65
    $region64: #{tpu_custom_call.1} parent=1 // pred_region
      _
    $region65: #{tpu_custom_call.1} parent=1 // pred_fallthru
      _
    // Predicated region
    $region66: #{tpu_custom_call.1} parent=1 // pred_check
      _
    $region67: #{tpu_custom_call.1} parent=1 // pred_check_branch
      %71 = sbr.rel (0) target = $region69
    $region68: #{tpu_custom_call.1} parent=1 // pred_region
      _
    $region69: #{tpu_custom_call.1} parent=1 // pred_fallthru
      _
    // Predicated region
    $region70: #{tpu_custom_call.1} parent=1 // pred_check
      _
    $region71: #{tpu_custom_call.1} parent=1 // pred_check_branch
      %73 = sbr.rel (0) target = $region73
    $region72: #{tpu_custom_call.1} parent=1 // pred_region
      _
    $region73: #{tpu_custom_call.1} parent=1 // pred_fallthru
      _
    // Predicated region
    $region74: #{tpu_custom_call.1} parent=1 // pred_check
      _
    $region75: #{tpu_custom_call.1} parent=1 // pred_check_branch
      %75 = sbr.rel (0) target = $region77
    $region76: #{tpu_custom_call.1} parent=1 // pred_region
      _
    $region77: #{tpu_custom_call.1} parent=1 // pred_fallthru
      _
    // Predicated region
    $region78: #{tpu_custom_call.1} parent=1 // pred_check
      _
    $region79: #{tpu_custom_call.1} parent=1 // pred_check_branch
      %77 = sbr.rel (0) target = $region81
    $region80: #{tpu_custom_call.1} parent=1 // pred_region
      _
    $region81: #{tpu_custom_call.1} parent=1 // pred_fallthru
      _
    // Predicated region
    $region82: #{tpu_custom_call.1} parent=1 // pred_check
      _
    $region83: #{tpu_custom_call.1} parent=1 // pred_check_branch
      %79 = sbr.rel (0) target = $region85
    $region84: #{tpu_custom_call.1} parent=1 // pred_region
      _
    $region85: #{tpu_custom_call.1} parent=1 // pred_fallthru
      _
    // Predicated region
    $region86: #{tpu_custom_call.1} parent=1 // pred_check
      _
    $region87: #{tpu_custom_call.1} parent=1 // pred_check_branch
      %81 = sbr.rel (0) target = $region89
    $region88: #{tpu_custom_call.1} parent=1 // pred_region
      _
    $region89: #{tpu_custom_call.1} parent=1 // pred_fallthru
      _
    // Predicated region
    $region90: #{tpu_custom_call.1} parent=1 // pred_check
      _
    $region91: #{tpu_custom_call.1} parent=1 // pred_check_branch
      %83 = sbr.rel (0) target = $region93
    $region92: #{tpu_custom_call.1} parent=1 // pred_region
      _
    $region93: #{tpu_custom_call.1} parent=1 // pred_fallthru
      _
    %v84 = vld [vmem:[%s0] sm:$0xff]
    %v85 = vld [vmem:[%s0 + $0x8] sm:$0xff]
    %v86 = vld [vmem:[%s1] sm:$0xff]
    %v87 = vld [vmem:[%s1 + $0x8] sm:$0xff]
    %v88 = vld [vmem:[%s1 + $0x10] sm:$0xff]
    %v89 = vld [vmem:[%s1 + $0x18] sm:$0xff]
    %v90 = vld [vmem:[%s2] sm:$0xff]
    %v91 = vld [vmem:[%s2 + $0x8] sm:$0xff]
    %v92 = vld [vmem:[%s2 + $0x10] sm:$0xff]
    %v93 = vld [vmem:[%s2 + $0x18] sm:$0xff]
    %vm94 = vcmask 261120
    %v96 = vsel %vm94, %v86, 0
    %v99 = vsel %vm94, %v87, 0
    %v102 = vsel %vm94, %v88, 0
    %v105 = vsel %vm94, %v89, 0
    %107 = vmatpush.msra.mxu0 0.0
    %108 = vmatpush.msra.mxu0 0.0
    %109 = vmatpush.msra.mxu0 0.0
    %110 = vmatpush.msra.mxu0 0.0
    %111 = vmatpush.msra.mxu0 0.0
    %112 = vmatpush.msra.mxu0 0.0
    %113 = vmatpush.msra.mxu0 0.0
    %114 = vmatpush.msra.mxu0 0.0
    %115 = vmatpush.msra.mxu0 0.0
    %116 = vmatpush.msra.mxu0 0.0
    %117 = vmatpush.msra.mxu0 0.0
    %118 = vmatpush.msra.mxu0 0.0
    %119 = vmatpush.msra.mxu0 %v93
    %120 = vmatpush.msra.mxu0 %v92
    %121 = vmatpush.msra.mxu0 %v91
    %122 = vmatpush.msra.mxu0 %v90
    %123 = vmatmul.f32.gmra.mxu0 %v96
    %v124 = vpop.f32.mrf.mxu0
    %v125 = vadd.f32 0.0, %v124
    %126 = vmatmul.f32.gmra.mxu0 %v99
    %v127 = vpop.f32.mrf.mxu0
    %v128 = vadd.f32 0.0, %v127
    %129 = vmatmul.f32.gmra.mxu0 %v102
    %v130 = vpop.f32.mrf.mxu0
    %v131 = vadd.f32 0.0, %v130
    %132 = vmatmul.f32.gmra.mxu0 %v105
    %v133 = vpop.f32.mrf.mxu0
    %v134 = vadd.f32 0.0, %v133
    %135 = vdwg.mxu0
    %v136 = vld [vmem:[%s4] sm:$0xff]
    %v137 = vld [vmem:[%s4 + $0x8] sm:$0xff]
    %v138 = vld [vmem:[%s4 + $0x10] sm:$0xff]
    %v139 = vld [vmem:[%s4 + $0x18] sm:$0xff]
    %v141 = vsel %vm94, %v125, 0
    %v144 = vsel %vm94, %v128, 0
    %v147 = vsel %vm94, %v131, 0
    %v150 = vsel %vm94, %v134, 0
    %152 = vmatpush.msra.mxu0 0.0
    %153 = vmatpush.msra.mxu0 0.0
    %154 = vmatpush.msra.mxu0 0.0
    %155 = vmatpush.msra.mxu0 0.0
    %156 = vmatpush.msra.mxu0 0.0
    %157 = vmatpush.msra.mxu0 0.0
    %158 = vmatpush.msra.mxu0 0.0
    %159 = vmatpush.msra.mxu0 0.0
    %160 = vmatpush.msra.mxu0 0.0
    %161 = vmatpush.msra.mxu0 0.0
    %162 = vmatpush.msra.mxu0 0.0
    %163 = vmatpush.msra.mxu0 0.0
    %164 = vmatpush.msra.mxu0 %v139
    %165 = vmatpush.msra.mxu0 %v138
    %166 = vmatpush.msra.mxu0 %v137
    %167 = vmatpush.msra.mxu0 %v136
    %168 = vmatmul.f32.gmra.mxu0 %v141
    %v169 = vpop.f32.mrf.mxu0
    %v170 = vadd.f32 0.0, %v169
    %171 = vmatmul.f32.gmra.mxu0 %v144
    %v172 = vpop.f32.mrf.mxu0
    %v173 = vadd.f32 0.0, %v172
    %174 = vmatmul.f32.gmra.mxu0 %v147
    %v175 = vpop.f32.mrf.mxu0
    %v176 = vadd.f32 0.0, %v175
    %177 = vmatmul.f32.gmra.mxu0 %v150
    %v178 = vpop.f32.mrf.mxu0
    %v179 = vadd.f32 0.0, %v178
    %180 = vdwg.mxu0
    %v181 = vld [vmem:[%s3] sm:$0x1]
    %v183 = vsel %vm94, %v181, 0
    %185 = vmatpush.xpose.msra.mxu0 0.0
    %186 = vmatpush.xpose.msra.mxu0 0.0
    %187 = vmatpush.xpose.msra.mxu0 0.0
    %188 = vmatpush.xpose.msra.mxu0 0.0
    %189 = vmatpush.xpose.msra.mxu0 0.0
    %190 = vmatpush.xpose.msra.mxu0 0.0
    %191 = vmatpush.xpose.msra.mxu0 0.0
    %192 = vmatpush.xpose.msra.mxu0 0.0
    %193 = vmatpush.xpose.msra.mxu0 0.0
    %194 = vmatpush.xpose.msra.mxu0 0.0
    %195 = vmatpush.xpose.msra.mxu0 0.0
    %196 = vmatpush.xpose.msra.mxu0 0.0
    %197 = vmatpush.xpose.msra.mxu0 %v150
    %198 = vmatpush.xpose.msra.mxu0 %v147
    %199 = vmatpush.xpose.msra.mxu0 %v144
    %200 = vmatpush.xpose.msra.mxu0 %v141
    %201 = vmatmul.f32.gmra.mxu0 %v183
    %v202 = vpop.f32.mrf.mxu0
    %v203 = vadd.f32 0.0, %v202
    %204 = vdwg.mxu0
    %v205 = vld [vmem:[%s5] sm:$0xff]
    %v206 = vld [vmem:[%s5 + $0x8] sm:$0xff]
    %v207 = vld [vmem:[%s5 + $0x10] sm:$0xff]
    %v208 = vld [vmem:[%s5 + $0x18] sm:$0xff]
    %210 = vset.pattern.permute.xlu0 0
    %211 = vperm.xlu0 %210, %v170
    %v212 = vpop.permute.xlu0 %211
    %215 = vset.pattern.permute.xlu0 0
    %216 = vperm.xlu0 %215, %v173
    %v217 = vpop.permute.xlu0 %216
    %220 = vset.pattern.permute.xlu0 0
    %221 = vperm.xlu0 %220, %v176
    %v222 = vpop.permute.xlu0 %221
    %225 = vset.pattern.permute.xlu0 0
    %226 = vperm.xlu0 %225, %v179
    %v227 = vpop.permute.xlu0 %226
    %v229 = vperm.slane %v203, 0
    %v230 = vadd.f32 %v212, %v229
    %v231 = vadd.f32 %v217, %v229
    %v232 = vadd.f32 %v222, %v229
    %v233 = vadd.f32 %v227, %v229
    %vm234 = vcmp.gt.f32.partialorder %v230, 0.0
    %vm235 = vcmp.gt.f32.partialorder %v231, 0.0
    %vm236 = vcmp.gt.f32.partialorder %v232, 0.0
    %vm237 = vcmp.gt.f32.partialorder %v233, 0.0
    %v238 = vmul.f32 %v230, 0.01
    %v239 = vmul.f32 %v231, 0.01
    %v240 = vmul.f32 %v232, 0.01
    %v241 = vmul.f32 %v233, 0.01
    %v242 = vsel %vm234, %v230, %v238
    %v243 = vsel %vm235, %v231, %v239
    %v244 = vsel %vm236, %v232, %v240
    %v245 = vsel %vm237, %v233, %v241
    %vm246 = vcmp.gt.f32.partialorder %v205, 0.0
    %vm247 = vcmp.gt.f32.partialorder %v206, 0.0
    %vm248 = vcmp.gt.f32.partialorder %v207, 0.0
    %vm249 = vcmp.gt.f32.partialorder %v208, 0.0
    %v250 = vsel %vm246, %v242, -1e+30
    %v251 = vsel %vm247, %v243, -1e+30
    %v252 = vsel %vm248, %v244, -1e+30
    %v253 = vsel %vm249, %v245, -1e+30
    %v254 = vsel %vm94, %v250, -inf
    %255 = vmax.xlane.f32.xlu0 %v254
    %v256 = vpop.xlane.xlu0 %255
    %v257 = vsel %vm94, %v251, -inf
    %258 = vmax.xlane.f32.xlu0 %v257
    %v259 = vpop.xlane.xlu0 %258
    %v260 = vsel %vm94, %v252, -inf
    %261 = vmax.xlane.f32.xlu0 %v260
    %v262 = vpop.xlane.xlu0 %261
    %v263 = vsel %vm94, %v253, -inf
    %264 = vmax.xlane.f32.xlu0 %v263
    %v265 = vpop.xlane.xlu0 %264
    %v266 = vsub.f32 %v250, %v256
    %v267 = vsub.f32 %v251, %v259
    %v268 = vsub.f32 %v252, %v262
    %v269 = vsub.f32 %v253, %v265
    %v270 = vmul.f32 %v266, 1.442695
    %v271 = vpow.pop %v270
    %v272 = vmul.f32 %v267, 1.442695
    %v273 = vpow.pop %v272
    %v274 = vmul.f32 %v268, 1.442695
    %v275 = vpow.pop %v274
    %v276 = vmul.f32 %v269, 1.442695
    %v277 = vpow.pop %v276
    %v278 = vsel %vm94, %v271, 0.0
    %279 = vadd.xlane.f32.xlu0 %v278
    %v280 = vpop.xlane.xlu0 %279
    %v281 = vsel %vm94, %v273, 0.0
    %282 = vadd.xlane.f32.xlu0 %v281
    %v283 = vpop.xlane.xlu0 %282
    %v284 = vsel %vm94, %v275, 0.0
    %285 = vadd.xlane.f32.xlu0 %v284
    %v286 = vpop.xlane.xlu0 %285
    %v287 = vsel %vm94, %v277, 0.0
    %288 = vadd.xlane.f32.xlu0 %v287
    %v289 = vpop.xlane.xlu0 %288
    %v290 = vrcp.pop %v280
    %v291 = vrcp.pop %v283
    %v292 = vrcp.pop %v286
    %v293 = vrcp.pop %v289
    %v294 = vmul.f32 %v271, %v290
    %v295 = vmul.f32 %v273, %v291
    %v296 = vmul.f32 %v275, %v292
    %v297 = vmul.f32 %v277, %v293
    %v299 = vsel %vm94, %v294, 0
    %v302 = vsel %vm94, %v295, 0
    %v305 = vsel %vm94, %v296, 0
    %v308 = vsel %vm94, %v297, 0
    %310 = vmatpush.msra.mxu0 0.0
    %311 = vmatpush.msra.mxu0 0.0
    %312 = vmatpush.msra.mxu0 0.0
    %313 = vmatpush.msra.mxu0 0.0
    %314 = vmatpush.msra.mxu0 0.0
    %315 = vmatpush.msra.mxu0 0.0
    %316 = vmatpush.msra.mxu0 0.0
    %317 = vmatpush.msra.mxu0 0.0
    %318 = vmatpush.msra.mxu0 0.0
    %319 = vmatpush.msra.mxu0 0.0
    %320 = vmatpush.msra.mxu0 0.0
    %321 = vmatpush.msra.mxu0 0.0
    %322 = vmatpush.msra.mxu0 %v134
    %323 = vmatpush.msra.mxu0 %v131
    %324 = vmatpush.msra.mxu0 %v128
    %325 = vmatpush.msra.mxu0 %v125
    %326 = vmatmul.f32.gmra.mxu0 %v299
    %v327 = vpop.f32.mrf.mxu0
    %v328 = vadd.f32 0.0, %v327
    %329 = vmatmul.f32.gmra.mxu0 %v302
    %v330 = vpop.f32.mrf.mxu0
    %v331 = vadd.f32 0.0, %v330
    %332 = vmatmul.f32.gmra.mxu0 %v305
    %v333 = vpop.f32.mrf.mxu0
    %v334 = vadd.f32 0.0, %v333
    %335 = vmatmul.f32.gmra.mxu0 %v308
    %v336 = vpop.f32.mrf.mxu0
    %v337 = vadd.f32 0.0, %v336
    %338 = vdwg.mxu0
    %v339 = vld [vmem:[%s6] sm:$0xff]
    %v340 = vld [vmem:[%s6 + $0x8] sm:$0xff]
    %v341 = vld [vmem:[%s6 + $0x10] sm:$0xff]
    %v342 = vld [vmem:[%s6 + $0x18] sm:$0xff]
    %343 = vmatpush.msra.mxu0 0.0
    %344 = vmatpush.msra.mxu0 0.0
    %345 = vmatpush.msra.mxu0 0.0
    %346 = vmatpush.msra.mxu0 0.0
    %347 = vmatpush.msra.mxu0 0.0
    %348 = vmatpush.msra.mxu0 0.0
    %349 = vmatpush.msra.mxu0 0.0
    %350 = vmatpush.msra.mxu0 0.0
    %351 = vmatpush.msra.mxu0 0.0
    %352 = vmatpush.msra.mxu0 0.0
    %353 = vmatpush.msra.mxu0 0.0
    %354 = vmatpush.msra.mxu0 0.0
    %355 = vmatpush.msra.mxu0 %v342
    %356 = vmatpush.msra.mxu0 %v341
    %357 = vmatpush.msra.mxu0 %v340
    %358 = vmatpush.msra.mxu0 %v339
    %359 = vmatmul.f32.gmra.mxu0 %v96
    %v360 = vpop.f32.mrf.mxu0
    %v361 = vadd.f32 0.0, %v360
    %362 = vmatmul.f32.gmra.mxu0 %v99
    %v363 = vpop.f32.mrf.mxu0
    %v364 = vadd.f32 0.0, %v363
    %365 = vmatmul.f32.gmra.mxu0 %v102
    %v366 = vpop.f32.mrf.mxu0
    %v367 = vadd.f32 0.0, %v366
    %368 = vmatmul.f32.gmra.mxu0 %v105
    %v369 = vpop.f32.mrf.mxu0
    %v370 = vadd.f32 0.0, %v369
    %371 = vdwg.mxu0
    %v372 = vld [vmem:[%s8] sm:$0xff]
    %v373 = vld [vmem:[%s8 + $0x8] sm:$0xff]
    %v374 = vld [vmem:[%s8 + $0x10] sm:$0xff]
    %v375 = vld [vmem:[%s8 + $0x18] sm:$0xff]
    %v377 = vsel %vm94, %v361, 0
    %v380 = vsel %vm94, %v364, 0
    %v383 = vsel %vm94, %v367, 0
    %v386 = vsel %vm94, %v370, 0
    %388 = vmatpush.msra.mxu0 0.0
    %389 = vmatpush.msra.mxu0 0.0
    %390 = vmatpush.msra.mxu0 0.0
    %391 = vmatpush.msra.mxu0 0.0
    %392 = vmatpush.msra.mxu0 0.0
    %393 = vmatpush.msra.mxu0 0.0
    %394 = vmatpush.msra.mxu0 0.0
    %395 = vmatpush.msra.mxu0 0.0
    %396 = vmatpush.msra.mxu0 0.0
    %397 = vmatpush.msra.mxu0 0.0
    %398 = vmatpush.msra.mxu0 0.0
    %399 = vmatpush.msra.mxu0 0.0
    %400 = vmatpush.msra.mxu0 %v375
    %401 = vmatpush.msra.mxu0 %v374
    %402 = vmatpush.msra.mxu0 %v373
    %403 = vmatpush.msra.mxu0 %v372
    %404 = vmatmul.f32.gmra.mxu0 %v377
    %v405 = vpop.f32.mrf.mxu0
    %v406 = vadd.f32 0.0, %v405
    %407 = vmatmul.f32.gmra.mxu0 %v380
    %v408 = vpop.f32.mrf.mxu0
    %v409 = vadd.f32 0.0, %v408
    %410 = vmatmul.f32.gmra.mxu0 %v383
    %v411 = vpop.f32.mrf.mxu0
    %v412 = vadd.f32 0.0, %v411
    %413 = vmatmul.f32.gmra.mxu0 %v386
    %v414 = vpop.f32.mrf.mxu0
    %v415 = vadd.f32 0.0, %v414
    %416 = vdwg.mxu0
    %v417 = vld [vmem:[%s7] sm:$0x1]
    %v419 = vsel %vm94, %v417, 0
    %421 = vmatpush.xpose.msra.mxu0 0.0
    %422 = vmatpush.xpose.msra.mxu0 0.0
    %423 = vmatpush.xpose.msra.mxu0 0.0
    %424 = vmatpush.xpose.msra.mxu0 0.0
    %425 = vmatpush.xpose.msra.mxu0 0.0
    %426 = vmatpush.xpose.msra.mxu0 0.0
    %427 = vmatpush.xpose.msra.mxu0 0.0
    %428 = vmatpush.xpose.msra.mxu0 0.0
    %429 = vmatpush.xpose.msra.mxu0 0.0
    %430 = vmatpush.xpose.msra.mxu0 0.0
    %431 = vmatpush.xpose.msra.mxu0 0.0
    %432 = vmatpush.xpose.msra.mxu0 0.0
    %433 = vmatpush.xpose.msra.mxu0 %v386
    %434 = vmatpush.xpose.msra.mxu0 %v383
    %435 = vmatpush.xpose.msra.mxu0 %v380
    %436 = vmatpush.xpose.msra.mxu0 %v377
    %437 = vmatmul.f32.gmra.mxu0 %v419
    %v438 = vpop.f32.mrf.mxu0
    %v439 = vadd.f32 0.0, %v438
    %440 = vdwg.mxu0
    %v441 = vld [vmem:[%s9] sm:$0xff]
    %v442 = vld [vmem:[%s9 + $0x8] sm:$0xff]
    %v443 = vld [vmem:[%s9 + $0x10] sm:$0xff]
    %v444 = vld [vmem:[%s9 + $0x18] sm:$0xff]
    %446 = vset.pattern.permute.xlu0 0
    %447 = vperm.xlu0 %446, %v406
    %v448 = vpop.permute.xlu0 %447
    %451 = vset.pattern.permute.xlu0 0
    %452 = vperm.xlu0 %451, %v409
    %v453 = vpop.permute.xlu0 %452
    %456 = vset.pattern.permute.xlu0 0
    %457 = vperm.xlu0 %456, %v412
    %v458 = vpop.permute.xlu0 %457
    %461 = vset.pattern.permute.xlu0 0
    %462 = vperm.xlu0 %461, %v415
    %v463 = vpop.permute.xlu0 %462
    %v465 = vperm.slane %v439, 0
    %v466 = vadd.f32 %v448, %v465
    %v467 = vadd.f32 %v453, %v465
    %v468 = vadd.f32 %v458, %v465
    %v469 = vadd.f32 %v463, %v465
    %vm470 = vcmp.gt.f32.partialorder %v466, 0.0
    %vm471 = vcmp.gt.f32.partialorder %v467, 0.0
    %vm472 = vcmp.gt.f32.partialorder %v468, 0.0
    %vm473 = vcmp.gt.f32.partialorder %v469, 0.0
    %v474 = vmul.f32 %v466, 0.01
    %v475 = vmul.f32 %v467, 0.01
    %v476 = vmul.f32 %v468, 0.01
    %v477 = vmul.f32 %v469, 0.01
    %v478 = vsel %vm470, %v466, %v474
    %v479 = vsel %vm471, %v467, %v475
    %v480 = vsel %vm472, %v468, %v476
    %v481 = vsel %vm473, %v469, %v477
    %vm482 = vcmp.gt.f32.partialorder %v441, 0.0
    %vm483 = vcmp.gt.f32.partialorder %v442, 0.0
    %vm484 = vcmp.gt.f32.partialorder %v443, 0.0
    %vm485 = vcmp.gt.f32.partialorder %v444, 0.0
    %v486 = vsel %vm482, %v478, -1e+30
    %v487 = vsel %vm483, %v479, -1e+30
    %v488 = vsel %vm484, %v480, -1e+30
    %v489 = vsel %vm485, %v481, -1e+30
    %v490 = vsel %vm94, %v486, -inf
    %491 = vmax.xlane.f32.xlu0 %v490
    %v492 = vpop.xlane.xlu0 %491
    %v493 = vsel %vm94, %v487, -inf
    %494 = vmax.xlane.f32.xlu0 %v493
    %v495 = vpop.xlane.xlu0 %494
    %v496 = vsel %vm94, %v488, -inf
    %497 = vmax.xlane.f32.xlu0 %v496
    %v498 = vpop.xlane.xlu0 %497
    %v499 = vsel %vm94, %v489, -inf
    %500 = vmax.xlane.f32.xlu0 %v499
    %v501 = vpop.xlane.xlu0 %500
    %v502 = vsub.f32 %v486, %v492
    %v503 = vsub.f32 %v487, %v495
    %v504 = vsub.f32 %v488, %v498
    %v505 = vsub.f32 %v489, %v501
    %v506 = vmul.f32 %v502, 1.442695
    %v507 = vpow.pop %v506
    %v508 = vmul.f32 %v503, 1.442695
    %v509 = vpow.pop %v508
    %v510 = vmul.f32 %v504, 1.442695
    %v511 = vpow.pop %v510
    %v512 = vmul.f32 %v505, 1.442695
    %v513 = vpow.pop %v512
    %v514 = vsel %vm94, %v507, 0.0
    %515 = vadd.xlane.f32.xlu0 %v514
    %v516 = vpop.xlane.xlu0 %515
    %v517 = vsel %vm94, %v509, 0.0
    %518 = vadd.xlane.f32.xlu0 %v517
    %v519 = vpop.xlane.xlu0 %518
    %v520 = vsel %vm94, %v511, 0.0
    %521 = vadd.xlane.f32.xlu0 %v520
    %v522 = vpop.xlane.xlu0 %521
    %v523 = vsel %vm94, %v513, 0.0
    %524 = vadd.xlane.f32.xlu0 %v523
    %v525 = vpop.xlane.xlu0 %524
    %v526 = vrcp.pop %v516
    %v527 = vrcp.pop %v519
    %v528 = vrcp.pop %v522
    %v529 = vrcp.pop %v525
    %v530 = vmul.f32 %v507, %v526
    %v531 = vmul.f32 %v509, %v527
    %v532 = vmul.f32 %v511, %v528
    %v533 = vmul.f32 %v513, %v529
    %v535 = vsel %vm94, %v530, 0
    %v538 = vsel %vm94, %v531, 0
    %v541 = vsel %vm94, %v532, 0
    %v544 = vsel %vm94, %v533, 0
    %546 = vmatpush.msra.mxu0 0.0
    %547 = vmatpush.msra.mxu0 0.0
    %548 = vmatpush.msra.mxu0 0.0
    %549 = vmatpush.msra.mxu0 0.0
    %550 = vmatpush.msra.mxu0 0.0
    %551 = vmatpush.msra.mxu0 0.0
    %552 = vmatpush.msra.mxu0 0.0
    %553 = vmatpush.msra.mxu0 0.0
    %554 = vmatpush.msra.mxu0 0.0
    %555 = vmatpush.msra.mxu0 0.0
    %556 = vmatpush.msra.mxu0 0.0
    %557 = vmatpush.msra.mxu0 0.0
    %558 = vmatpush.msra.mxu0 %v370
    %559 = vmatpush.msra.mxu0 %v367
    %560 = vmatpush.msra.mxu0 %v364
    %561 = vmatpush.msra.mxu0 %v361
    %562 = vmatmul.f32.gmra.mxu0 %v535
    %v563 = vpop.f32.mrf.mxu0
    %v564 = vadd.f32 0.0, %v563
    %565 = vmatmul.f32.gmra.mxu0 %v538
    %v566 = vpop.f32.mrf.mxu0
    %v567 = vadd.f32 0.0, %v566
    %568 = vmatmul.f32.gmra.mxu0 %v541
    %v569 = vpop.f32.mrf.mxu0
    %v570 = vadd.f32 0.0, %v569
    %571 = vmatmul.f32.gmra.mxu0 %v544
    %v572 = vpop.f32.mrf.mxu0
    %v573 = vadd.f32 0.0, %v572
    %574 = vdwg.mxu0
    %575 = vst.msk [vmem:[#allocation2] sm:$0xff] %vm94, %v84
    %576 = vst.msk [vmem:[#allocation2 + $0x8] sm:$0xff] %vm94, %v85
    %577 = vst.msk [vmem:[#allocation2 + $0x10] sm:$0xff] %vm94, %v86
    %578 = vst.msk [vmem:[#allocation2 + $0x18] sm:$0xff] %vm94, %v87
    %579 = vst.msk [vmem:[#allocation2 + $0x20] sm:$0xff] %vm94, %v88
    %580 = vst.msk [vmem:[#allocation2 + $0x28] sm:$0xff] %vm94, %v89
    %v581 = vld [vmem:[#allocation2] sm:$0xff]
    %v582 = vld [vmem:[#allocation2 + $0x8] sm:$0xff]
    %v583 = vld [vmem:[#allocation2 + $0x10] sm:$0xff]
    %v584 = vld [vmem:[#allocation2 + $0x18] sm:$0xff]
    %v585 = vld [vmem:[#allocation2 + $0x20] sm:$0xff]
    %v586 = vld [vmem:[#allocation2 + $0x28] sm:$0xff]
    %v587 = vld [vmem:[%s10] sm:$0xff]
    %v588 = vld [vmem:[%s10 + $0x8] sm:$0xff]
    %v589 = vld [vmem:[%s10 + $0x10] sm:$0xff]
    %v590 = vld [vmem:[%s10 + $0x18] sm:$0xff]
    %v592 = vsel %vm94, %v581, 0
    %v595 = vsel %vm94, %v582, 0
    %v598 = vsel %vm94, %v583, 0
    %v601 = vsel %vm94, %v584, 0
    %v604 = vsel %vm94, %v585, 0
    %v607 = vsel %vm94, %v586, 0
    %609 = vmatpush.msra.mxu0 0.0
    %610 = vmatpush.msra.mxu0 0.0
    %611 = vmatpush.msra.mxu0 0.0
    %612 = vmatpush.msra.mxu0 0.0
    %613 = vmatpush.msra.mxu0 0.0
    %614 = vmatpush.msra.mxu0 0.0
    %615 = vmatpush.msra.mxu0 0.0
    %616 = vmatpush.msra.mxu0 0.0
    %617 = vmatpush.msra.mxu0 0.0
    %618 = vmatpush.msra.mxu0 0.0
    %619 = vmatpush.msra.mxu0 0.0
    %620 = vmatpush.msra.mxu0 0.0
    %621 = vmatpush.msra.mxu0 %v590
    %622 = vmatpush.msra.mxu0 %v589
    %623 = vmatpush.msra.mxu0 %v588
    %624 = vmatpush.msra.mxu0 %v587
    %625 = vmatmul.f32.gmra.mxu0 %v592
    %v626 = vpop.f32.mrf.mxu0
    %v627 = vadd.f32 0.0, %v626
    %628 = vmatmul.f32.gmra.mxu0 %v595
    %v629 = vpop.f32.mrf.mxu0
    %v630 = vadd.f32 0.0, %v629
    %631 = vmatmul.f32.gmra.mxu0 %v598
    %v632 = vpop.f32.mrf.mxu0
    %v633 = vadd.f32 0.0, %v632
    %634 = vmatmul.f32.gmra.mxu0 %v601
    %v635 = vpop.f32.mrf.mxu0
    %v636 = vadd.f32 0.0, %v635
    %637 = vmatmul.f32.gmra.mxu0 %v604
    %v638 = vpop.f32.mrf.mxu0
    %v639 = vadd.f32 0.0, %v638
    %640 = vmatmul.f32.gmra.mxu0 %v607
    %v641 = vpop.f32.mrf.mxu0
    %v642 = vadd.f32 0.0, %v641
    %643 = vdwg.mxu0
    %v644 = vld [vmem:[%s12] sm:$0xff]
    %v645 = vld [vmem:[%s12 + $0x8] sm:$0xff]
    %v646 = vld [vmem:[%s12 + $0x10] sm:$0xff]
    %v647 = vld [vmem:[%s12 + $0x18] sm:$0xff]
    %v649 = vsel %vm94, %v627, 0
    %v652 = vsel %vm94, %v630, 0
    %654 = vmatpush.msra.mxu0 0.0
    %655 = vmatpush.msra.mxu0 0.0
    %656 = vmatpush.msra.mxu0 0.0
    %657 = vmatpush.msra.mxu0 0.0
    %658 = vmatpush.msra.mxu0 0.0
    %659 = vmatpush.msra.mxu0 0.0
    %660 = vmatpush.msra.mxu0 0.0
    %661 = vmatpush.msra.mxu0 0.0
    %662 = vmatpush.msra.mxu0 0.0
    %663 = vmatpush.msra.mxu0 0.0
    %664 = vmatpush.msra.mxu0 0.0
    %665 = vmatpush.msra.mxu0 0.0
    %666 = vmatpush.msra.mxu0 %v647
    %667 = vmatpush.msra.mxu0 %v646
    %668 = vmatpush.msra.mxu0 %v645
    %669 = vmatpush.msra.mxu0 %v644
    %670 = vmatmul.f32.gmra.mxu0 %v649
    %v671 = vpop.f32.mrf.mxu0
    %v672 = vadd.f32 0.0, %v671
    %673 = vmatmul.f32.gmra.mxu0 %v652
    %v674 = vpop.f32.mrf.mxu0
    %v675 = vadd.f32 0.0, %v674
    %676 = vdwg.mxu0
    %v677 = vld [vmem:[%s11] sm:$0x1]
    %v679 = vsel %vm94, %v677, 0
    %v682 = vsel %vm94, %v633, 0
    %v685 = vsel %vm94, %v636, 0
    %v688 = vsel %vm94, %v639, 0
    %v691 = vsel %vm94, %v642, 0
    %693 = vmatpush.xpose.msra.mxu0 0.0
    %694 = vmatpush.xpose.msra.mxu0 0.0
    %695 = vmatpush.xpose.msra.mxu0 0.0
    %696 = vmatpush.xpose.msra.mxu0 0.0
    %697 = vmatpush.xpose.msra.mxu0 0.0
    %698 = vmatpush.xpose.msra.mxu0 0.0
    %699 = vmatpush.xpose.msra.mxu0 0.0
    %700 = vmatpush.xpose.msra.mxu0 0.0
    %701 = vmatpush.xpose.msra.mxu0 0.0
    %702 = vmatpush.xpose.msra.mxu0 0.0
    %703 = vmatpush.xpose.msra.mxu0 %v691
    %704 = vmatpush.xpose.msra.mxu0 %v688
    %705 = vmatpush.xpose.msra.mxu0 %v685
    %706 = vmatpush.xpose.msra.mxu0 %v682
    %707 = vmatpush.xpose.msra.mxu0 %v652
    %708 = vmatpush.xpose.msra.mxu0 %v649
    %709 = vmatmul.f32.gmra.mxu0 %v679
    %v710 = vpop.f32.mrf.mxu0
    %v711 = vadd.f32 0.0, %v710
    %712 = vdwg.mxu0
    %v713 = vld [vmem:[%s13] sm:$0xff]
    %v714 = vld [vmem:[%s13 + $0x8] sm:$0xff]
    %716 = vset.pattern.permute.xlu0 0
    %717 = vperm.xlu0 %716, %v672
    %v718 = vpop.permute.xlu0 %717
    %721 = vset.pattern.permute.xlu0 0
    %722 = vperm.xlu0 %721, %v675
    %v723 = vpop.permute.xlu0 %722
    %v725 = vperm.slane %v711, 0
    %v726 = vadd.f32 %v718, %v725
    %v727 = vadd.f32 %v723, %v725
    %vm728 = vcmp.gt.f32.partialorder %v726, 0.0
    %vm729 = vcmp.gt.f32.partialorder %v727, 0.0
    %v730 = vmul.f32 %v726, 0.01
    %v731 = vmul.f32 %v727, 0.01
    %v732 = vsel %vm728, %v726, %v730
    %v733 = vsel %vm729, %v727, %v731
    %vm734 = vcmp.gt.f32.partialorder %v713, 0.0
    %vm735 = vcmp.gt.f32.partialorder %v714, 0.0
    %v736 = vsel %vm734, %v732, -1e+30
    %v737 = vsel %vm735, %v733, -1e+30
    %vm738 = vcmask 392192
    %v739 = vsel %vm738, %v736, -inf
    %740 = vmax.xlane.f32.xlu0 %v739
    %v741 = vpop.xlane.xlu0 %740
    %v742 = vsel %vm738, %v737, -inf
    %743 = vmax.xlane.f32.xlu0 %v742
    %v744 = vpop.xlane.xlu0 %743
    %v745 = vsub.f32 %v736, %v741
    %v746 = vsub.f32 %v737, %v744
    %v747 = vmul.f32 %v745, 1.442695
    %v748 = vpow.pop %v747
    %v749 = vmul.f32 %v746, 1.442695
    %v750 = vpow.pop %v749
    %v751 = vsel %vm738, %v748, 0.0
    %752 = vadd.xlane.f32.xlu0 %v751
    %v753 = vpop.xlane.xlu0 %752
    %v754 = vsel %vm738, %v750, 0.0
    %755 = vadd.xlane.f32.xlu0 %v754
    %v756 = vpop.xlane.xlu0 %755
    %v757 = vrcp.pop %v753
    %v758 = vrcp.pop %v756
    %v759 = vmul.f32 %v748, %v757
    %v760 = vmul.f32 %v750, %v758
    %v762 = vsel %vm738, %v759, 0
    %v765 = vsel %vm738, %v760, 0
    %767 = vmatpush.msra.mxu0 0.0
    %768 = vmatpush.msra.mxu0 0.0
    %769 = vmatpush.msra.mxu0 0.0
    %770 = vmatpush.msra.mxu0 0.0
    %771 = vmatpush.msra.mxu0 0.0
    %772 = vmatpush.msra.mxu0 0.0
    %773 = vmatpush.msra.mxu0 0.0
    %774 = vmatpush.msra.mxu0 0.0
    %775 = vmatpush.msra.mxu0 0.0
    %776 = vmatpush.msra.mxu0 0.0
    %777 = vmatpush.msra.mxu0 %v642
    %778 = vmatpush.msra.mxu0 %v639
    %779 = vmatpush.msra.mxu0 %v636
    %780 = vmatpush.msra.mxu0 %v633
    %781 = vmatpush.msra.mxu0 %v630
    %782 = vmatpush.msra.mxu0 %v627
    %783 = vmatmul.f32.gmra.mxu0 %v762
    %v784 = vpop.f32.mrf.mxu0
    %v785 = vadd.f32 0.0, %v784
    %786 = vmatmul.f32.gmra.mxu0 %v765
    %v787 = vpop.f32.mrf.mxu0
    %v788 = vadd.f32 0.0, %v787
    %789 = vdwg.mxu0
    %v790 = vld [vmem:[%s14] sm:$0xff]
    %v791 = vld [vmem:[%s14 + $0x8] sm:$0xff]
    %v792 = vld [vmem:[%s14 + $0x10] sm:$0xff]
    %v793 = vld [vmem:[%s14 + $0x18] sm:$0xff]
    %v794 = vld [vmem:[%s15] sm:$0xff]
    %v795 = vld [vmem:[%s15 + $0x8] sm:$0xff]
    %v796 = vld [vmem:[%s15 + $0x10] sm:$0xff]
    %v797 = vld [vmem:[%s15 + $0x18] sm:$0xff]
    %v799 = vsel %vm94, %v328, 0
    %v802 = vsel %vm94, %v331, 0
    %v805 = vsel %vm94, %v334, 0
    %v808 = vsel %vm94, %v337, 0
    %810 = vmatpush.msra.mxu0 0.0
    %811 = vmatpush.msra.mxu0 0.0
    %812 = vmatpush.msra.mxu0 0.0
    %813 = vmatpush.msra.mxu0 0.0
    %814 = vmatpush.msra.mxu0 0.0
    %815 = vmatpush.msra.mxu0 0.0
    %816 = vmatpush.msra.mxu0 0.0
    %817 = vmatpush.msra.mxu0 0.0
    %818 = vmatpush.msra.mxu0 0.0
    %819 = vmatpush.msra.mxu0 0.0
    %820 = vmatpush.msra.mxu0 0.0
    %821 = vmatpush.msra.mxu0 0.0
    %822 = vmatpush.msra.mxu0 %v797
    %823 = vmatpush.msra.mxu0 %v796
    %824 = vmatpush.msra.mxu0 %v795
    %825 = vmatpush.msra.mxu0 %v794
    %826 = vmatmul.f32.gmra.mxu0 %v799
    %v827 = vpop.f32.mrf.mxu0
    %v828 = vadd.f32 0.0, %v827
    %829 = vmatmul.f32.gmra.mxu0 %v802
    %v830 = vpop.f32.mrf.mxu0
    %v831 = vadd.f32 0.0, %v830
    %832 = vmatmul.f32.gmra.mxu0 %v805
    %v833 = vpop.f32.mrf.mxu0
    %v834 = vadd.f32 0.0, %v833
    %835 = vmatmul.f32.gmra.mxu0 %v808
    %v836 = vpop.f32.mrf.mxu0
    %v837 = vadd.f32 0.0, %v836
    %838 = vdwg.mxu0
    %839 = vmatpush.msra.mxu0 0.0
    %840 = vmatpush.msra.mxu0 0.0
    %841 = vmatpush.msra.mxu0 0.0
    %842 = vmatpush.msra.mxu0 0.0
    %843 = vmatpush.msra.mxu0 0.0
    %844 = vmatpush.msra.mxu0 0.0
    %845 = vmatpush.msra.mxu0 0.0
    %846 = vmatpush.msra.mxu0 0.0
    %847 = vmatpush.msra.mxu0 0.0
    %848 = vmatpush.msra.mxu0 0.0
    %849 = vmatpush.msra.mxu0 0.0
    %850 = vmatpush.msra.mxu0 0.0
    %851 = vmatpush.msra.mxu0 %v793
    %852 = vmatpush.msra.mxu0 %v792
    %853 = vmatpush.msra.mxu0 %v791
    %854 = vmatpush.msra.mxu0 %v790
    %855 = vmatmul.f32.gmra.mxu0 %v96
    %v856 = vpop.f32.mrf.mxu0
    %v857 = vadd.f32 %v828, %v856
    %858 = vmatmul.f32.gmra.mxu0 %v99
    %v859 = vpop.f32.mrf.mxu0
    %v860 = vadd.f32 %v831, %v859
    %861 = vmatmul.f32.gmra.mxu0 %v102
    %v862 = vpop.f32.mrf.mxu0
    %v863 = vadd.f32 %v834, %v862
    %864 = vmatmul.f32.gmra.mxu0 %v105
    %v865 = vpop.f32.mrf.mxu0
    %v866 = vadd.f32 %v837, %v865
    %867 = vdwg.mxu0
    %v868 = vld [vmem:[#allocation3] sm:$0x1]
    %v870 = vperm.slane %v868, 0
    %v872 = vadd.f32 %v857, %v870
    %v873 = vadd.f32 %v860, %v870
    %v874 = vadd.f32 %v863, %v870
    %v875 = vadd.f32 %v866, %v870
    %v876 = vld [vmem:[%s17] sm:$0xff]
    %v877 = vld [vmem:[%s17 + $0x8] sm:$0xff]
    %v878 = vld [vmem:[%s17 + $0x10] sm:$0xff]
    %v879 = vld [vmem:[%s17 + $0x18] sm:$0xff]
    %v880 = vld [vmem:[%s18] sm:$0xff]
    %v881 = vld [vmem:[%s18 + $0x8] sm:$0xff]
    %v882 = vld [vmem:[%s18 + $0x10] sm:$0xff]
    %v883 = vld [vmem:[%s18 + $0x18] sm:$0xff]
    %v885 = vsel %vm94, %v564, 0
    %v888 = vsel %vm94, %v567, 0
    %v891 = vsel %vm94, %v570, 0
    %v894 = vsel %vm94, %v573, 0
    %896 = vmatpush.msra.mxu0 0.0
    %897 = vmatpush.msra.mxu0 0.0
    %898 = vmatpush.msra.mxu0 0.0
    %899 = vmatpush.msra.mxu0 0.0
    %900 = vmatpush.msra.mxu0 0.0
    %901 = vmatpush.msra.mxu0 0.0
    %902 = vmatpush.msra.mxu0 0.0
    %903 = vmatpush.msra.mxu0 0.0
    %904 = vmatpush.msra.mxu0 0.0
    %905 = vmatpush.msra.mxu0 0.0
    %906 = vmatpush.msra.mxu0 0.0
    %907 = vmatpush.msra.mxu0 0.0
    %908 = vmatpush.msra.mxu0 %v883
    %909 = vmatpush.msra.mxu0 %v882
    %910 = vmatpush.msra.mxu0 %v881
    %911 = vmatpush.msra.mxu0 %v880
    %912 = vmatmul.f32.gmra.mxu0 %v885
    %v913 = vpop.f32.mrf.mxu0
    %v914 = vadd.f32 0.0, %v913
    %915 = vmatmul.f32.gmra.mxu0 %v888
    %v916 = vpop.f32.mrf.mxu0
    %v917 = vadd.f32 0.0, %v916
    %918 = vmatmul.f32.gmra.mxu0 %v891
    %v919 = vpop.f32.mrf.mxu0
    %v920 = vadd.f32 0.0, %v919
    %921 = vmatmul.f32.gmra.mxu0 %v894
    %v922 = vpop.f32.mrf.mxu0
    %v923 = vadd.f32 0.0, %v922
    %924 = vdwg.mxu0
    %925 = vmatpush.msra.mxu0 0.0
    %926 = vmatpush.msra.mxu0 0.0
    %927 = vmatpush.msra.mxu0 0.0
    %928 = vmatpush.msra.mxu0 0.0
    %929 = vmatpush.msra.mxu0 0.0
    %930 = vmatpush.msra.mxu0 0.0
    %931 = vmatpush.msra.mxu0 0.0
    %932 = vmatpush.msra.mxu0 0.0
    %933 = vmatpush.msra.mxu0 0.0
    %934 = vmatpush.msra.mxu0 0.0
    %935 = vmatpush.msra.mxu0 0.0
    %936 = vmatpush.msra.mxu0 0.0
    %937 = vmatpush.msra.mxu0 %v879
    %938 = vmatpush.msra.mxu0 %v878
    %939 = vmatpush.msra.mxu0 %v877
    %940 = vmatpush.msra.mxu0 %v876
    %941 = vmatmul.f32.gmra.mxu0 %v96
    %v942 = vpop.f32.mrf.mxu0
    %v943 = vadd.f32 %v914, %v942
    %944 = vmatmul.f32.gmra.mxu0 %v99
    %v945 = vpop.f32.mrf.mxu0
    %v946 = vadd.f32 %v917, %v945
    %947 = vmatmul.f32.gmra.mxu0 %v102
    %v948 = vpop.f32.mrf.mxu0
    %v949 = vadd.f32 %v920, %v948
    %950 = vmatmul.f32.gmra.mxu0 %v105
    %v951 = vpop.f32.mrf.mxu0
    %v952 = vadd.f32 %v923, %v951
    %953 = vdwg.mxu0
    %v954 = vld [vmem:[#allocation4] sm:$0x1]
    %v956 = vperm.slane %v954, 0
    %v958 = vadd.f32 %v943, %v956
    %v959 = vadd.f32 %v946, %v956
    %v960 = vadd.f32 %v949, %v956
    %v961 = vadd.f32 %v952, %v956
    %v962 = vmax.f32 %v872, %v958
    %v963 = vmax.f32 %v873, %v959
    %v964 = vmax.f32 %v874, %v960
    %v965 = vmax.f32 %v875, %v961
    %v966 = vsub.f32 %v872, %v962
    %v967 = vsub.f32 %v873, %v963
    %v968 = vsub.f32 %v874, %v964
    %v969 = vsub.f32 %v875, %v965
    %v970 = vmul.f32 %v966, 1.442695
    %v971 = vpow.pop %v970
    %v972 = vmul.f32 %v967, 1.442695
    %v973 = vpow.pop %v972
    %v974 = vmul.f32 %v968, 1.442695
    %v975 = vpow.pop %v974
    %v976 = vmul.f32 %v969, 1.442695
    %v977 = vpow.pop %v976
    %v978 = vsub.f32 %v958, %v962
    %v979 = vsub.f32 %v959, %v963
    %v980 = vsub.f32 %v960, %v964
    %v981 = vsub.f32 %v961, %v965
    %v982 = vmul.f32 %v978, 1.442695
    %v983 = vpow.pop %v982
    %v984 = vmul.f32 %v979, 1.442695
    %v985 = vpow.pop %v984
    %v986 = vmul.f32 %v980, 1.442695
    %v987 = vpow.pop %v986
    %v988 = vmul.f32 %v981, 1.442695
    %v989 = vpow.pop %v988
    %v990 = vadd.f32 %v971, %v983
    %v991 = vadd.f32 %v973, %v985
    %v992 = vadd.f32 %v975, %v987
    %v993 = vadd.f32 %v977, %v989
    %v994 = vrcp.pop %v990
    %v995 = vrcp.pop %v991
    %v996 = vrcp.pop %v992
    %v997 = vrcp.pop %v993
    %v998 = vmul.f32 %v971, %v994
    %v999 = vmul.f32 %v973, %v995
    %v1000 = vmul.f32 %v975, %v996
    %v1001 = vmul.f32 %v977, %v997
    %1003 = vset.pattern.permute.xlu0 0
    %1004 = vperm.xlu0 %1003, %v998
    %v1005 = vpop.permute.xlu0 %1004
    %1008 = vset.pattern.permute.xlu0 0
    %1009 = vperm.xlu0 %1008, %v999
    %v1010 = vpop.permute.xlu0 %1009
    %1013 = vset.pattern.permute.xlu0 0
    %1014 = vperm.xlu0 %1013, %v1000
    %v1015 = vpop.permute.xlu0 %1014
    %1018 = vset.pattern.permute.xlu0 0
    %1019 = vperm.xlu0 %1018, %v1001
    %v1020 = vpop.permute.xlu0 %1019
    %v1022 = vmul.f32 %v1005, %v328
    %v1023 = vmul.f32 %v1010, %v331
    %v1024 = vmul.f32 %v1015, %v334
    %v1025 = vmul.f32 %v1020, %v337
    %v1026 = vadd.f32 %v86, %v1022
    %v1027 = vadd.f32 %v87, %v1023
    %v1028 = vadd.f32 %v88, %v1024
    %v1029 = vadd.f32 %v89, %v1025
    %v1030 = vmul.f32 %v983, %v994
    %v1031 = vmul.f32 %v985, %v995
    %v1032 = vmul.f32 %v987, %v996
    %v1033 = vmul.f32 %v989, %v997
    %1035 = vset.pattern.permute.xlu0 0
    %1036 = vperm.xlu0 %1035, %v1030
    %v1037 = vpop.permute.xlu0 %1036
    %1040 = vset.pattern.permute.xlu0 0
    %1041 = vperm.xlu0 %1040, %v1031
    %v1042 = vpop.permute.xlu0 %1041
    %1045 = vset.pattern.permute.xlu0 0
    %1046 = vperm.xlu0 %1045, %v1032
    %v1047 = vpop.permute.xlu0 %1046
    %1050 = vset.pattern.permute.xlu0 0
    %1051 = vperm.xlu0 %1050, %v1033
    %v1052 = vpop.permute.xlu0 %1051
    %v1054 = vmul.f32 %v1037, %v564
    %v1055 = vmul.f32 %v1042, %v567
    %v1056 = vmul.f32 %v1047, %v570
    %v1057 = vmul.f32 %v1052, %v573
    %v1058 = vadd.f32 %v1026, %v1054
    %v1059 = vadd.f32 %v1027, %v1055
    %v1060 = vadd.f32 %v1028, %v1056
    %v1061 = vadd.f32 %v1029, %v1057
    %1062 = vst.msk [vmem:[#allocation8] sm:$0xff] %vm94, %v1058
    %1063 = vst.msk [vmem:[#allocation8 + $0x8] sm:$0xff] %vm94, %v1059
    %1064 = vst.msk [vmem:[#allocation8 + $0x10] sm:$0xff] %vm94, %v1060
    %1065 = vst.msk [vmem:[#allocation8 + $0x18] sm:$0xff] %vm94, %v1061
    %v1066 = vld [vmem:[%s20] sm:$0xff]
    %v1067 = vld [vmem:[%s20 + $0x8] sm:$0xff]
    %v1068 = vld [vmem:[%s20 + $0x10] sm:$0xff]
    %v1069 = vld [vmem:[%s20 + $0x18] sm:$0xff]
    %v1070 = vld [vmem:[%s21] sm:$0xff]
    %v1071 = vld [vmem:[%s21 + $0x8] sm:$0xff]
    %v1072 = vld [vmem:[%s21 + $0x10] sm:$0xff]
    %v1073 = vld [vmem:[%s21 + $0x18] sm:$0xff]
    %v1075 = vsel %vm94, %v785, 0
    %v1078 = vsel %vm94, %v788, 0
    %1080 = vmatpush.msra.mxu0 0.0
    %1081 = vmatpush.msra.mxu0 0.0
    %1082 = vmatpush.msra.mxu0 0.0
    %1083 = vmatpush.msra.mxu0 0.0
    %1084 = vmatpush.msra.mxu0 0.0
    %1085 = vmatpush.msra.mxu0 0.0
    %1086 = vmatpush.msra.mxu0 0.0
    %1087 = vmatpush.msra.mxu0 0.0
    %1088 = vmatpush.msra.mxu0 0.0
    %1089 = vmatpush.msra.mxu0 0.0
    %1090 = vmatpush.msra.mxu0 0.0
    %1091 = vmatpush.msra.mxu0 0.0
    %1092 = vmatpush.msra.mxu0 %v1073
    %1093 = vmatpush.msra.mxu0 %v1072
    %1094 = vmatpush.msra.mxu0 %v1071
    %1095 = vmatpush.msra.mxu0 %v1070
    %1096 = vmatmul.f32.gmra.mxu0 %v1075
    %v1097 = vpop.f32.mrf.mxu0
    %v1098 = vadd.f32 0.0, %v1097
    %1099 = vmatmul.f32.gmra.mxu0 %v1078
    %v1100 = vpop.f32.mrf.mxu0
    %v1101 = vadd.f32 0.0, %v1100
    %1102 = vdwg.mxu0
    %v1104 = vsel %vm94, %v84, 0
    %v1107 = vsel %vm94, %v85, 0
    %1109 = vmatpush.msra.mxu0 0.0
    %1110 = vmatpush.msra.mxu0 0.0
    %1111 = vmatpush.msra.mxu0 0.0
    %1112 = vmatpush.msra.mxu0 0.0
    %1113 = vmatpush.msra.mxu0 0.0
    %1114 = vmatpush.msra.mxu0 0.0
    %1115 = vmatpush.msra.mxu0 0.0
    %1116 = vmatpush.msra.mxu0 0.0
    %1117 = vmatpush.msra.mxu0 0.0
    %1118 = vmatpush.msra.mxu0 0.0
    %1119 = vmatpush.msra.mxu0 0.0
    %1120 = vmatpush.msra.mxu0 0.0
    %1121 = vmatpush.msra.mxu0 %v1069
    %1122 = vmatpush.msra.mxu0 %v1068
    %1123 = vmatpush.msra.mxu0 %v1067
    %1124 = vmatpush.msra.mxu0 %v1066
    %1125 = vmatmul.f32.gmra.mxu0 %v1104
    %v1126 = vpop.f32.mrf.mxu0
    %v1127 = vadd.f32 %v1098, %v1126
    %1128 = vmatmul.f32.gmra.mxu0 %v1107
    %v1129 = vpop.f32.mrf.mxu0
    %v1130 = vadd.f32 %v1101, %v1129
    %1131 = vdwg.mxu0
    %v1132 = vld [vmem:[#allocation5] sm:$0x1]
    %v1134 = vperm.slane %v1132, 0
    %v1136 = vadd.f32 %v1127, %v1134
    %v1137 = vadd.f32 %v1130, %v1134
    %1139 = vset.pattern.permute.xlu0 0
    %1140 = vperm.xlu0 %1139, %v1136
    %v1141 = vpop.permute.xlu0 %1140
    %1144 = vset.pattern.permute.xlu0 0
    %1145 = vperm.xlu0 %1144, %v1137
    %v1146 = vpop.permute.xlu0 %1145
    %v1148 = vmul.f32 %v1141, %v785
    %v1149 = vmul.f32 %v1146, %v788
    %v1150 = vadd.f32 %v84, %v1148
    %v1151 = vadd.f32 %v85, %v1149
    %1152 = vst.msk [vmem:[#allocation6] sm:$0xff] %vm94, %v1150
    %1153 = vst.msk [vmem:[#allocation6 + $0x8] sm:$0xff] %vm94, %v1151
    // Predicated region
    $region94: #{tpu_custom_call.1} parent=1 // pred_check
      _
    $region95: #{tpu_custom_call.1} parent=1 // pred_check_branch
      %1155 = sbr.rel (0) target = $region97
    $region96: #{tpu_custom_call.1} parent=1 // pred_region
      %1157 = vsyncadd [#allocation7], 0
      %s1158 = sshll.u32 [#allocation6], 4
      %s1159 = int_to_ptr.vmem [resolvable:$true] %s1158
      %s1160 = sshll.u32 %s23, 4
      %s1161 = int_to_ptr.hbm [resolvable:$true] %s1160
      %1166 = dma.vmem_to_hbm [thread:$0]  %s1159, 256, %s1161, [#allocation7], 128, 128, 8
    $region97: #{tpu_custom_call.1} parent=1 // pred_fallthru
      _
    // Predicated region
    $region98: #{tpu_custom_call.1} parent=1 // pred_check
      _
    $region99: #{tpu_custom_call.1} parent=1 // pred_check_branch
      %1168 = sbr.rel (0) target = $region101
    $region100: #{tpu_custom_call.1} parent=1 // pred_region
      %1170 = vsyncadd [#allocation9], 0
      %s1171 = sshll.u32 [#allocation8], 4
      %s1172 = int_to_ptr.vmem [resolvable:$true] %s1171
      %s1173 = sshll.u32 %s24, 4
      %s1174 = int_to_ptr.hbm [resolvable:$true] %s1173
      %1179 = dma.vmem_to_hbm [thread:$0]  %s1172, 512, %s1174, [#allocation9], 128, 128, 8
    $region101: #{tpu_custom_call.1} parent=1 // pred_fallthru
      _
    // Predicated region
    $region102: #{tpu_custom_call.1} parent=1 // pred_check
      _
    $region103: #{tpu_custom_call.1} parent=1 // pred_check_branch
      %1181 = sbr.rel (0) target = $region105
    $region104: #{tpu_custom_call.1} parent=1 // pred_region
      %1183 = dma.done [#allocation7], 256
    $region105: #{tpu_custom_call.1} parent=1 // pred_fallthru
      _
    // Predicated region
    $region106: #{tpu_custom_call.1} parent=1 // pred_check
      _
    $region107: #{tpu_custom_call.1} parent=1 // pred_check_branch
      %1185 = sbr.rel (0) target = $region109
    $region108: #{tpu_custom_call.1} parent=1 // pred_region
      %1187 = dma.done [#allocation9], 512
    $region109: #{tpu_custom_call.1} parent=1 // pred_fallthru
      _
    %1188 = vsyncpa [#allocation7], 1
    %1189 = vsyncpa [#allocation9], 1

</llo_original>
